<compile_context>
chip_gen: v7x
topology: tpu7x:2x2x1
jax: 0.10.0
libtpu: 0.0.40
codegen_flags: <defaults>
</compile_context>

<pallas_src>
import numpy as np
import jax
import jax.numpy as jnp
from jax.experimental import pallas as pl
from jax.experimental.pallas import tpu as pltpu

LEAKY_SLOPE = 0.2
BN_EPS = 1e-5


def _leaky(y):
    return jnp.where(y > 0, y, LEAKY_SLOPE * y)


def _pick_row_tile(r, max_tile=8192):
    """Largest pixel tile <= max_tile dividing r (prefer the whole row: fewest grid steps)."""
    if r <= max_tile:
        return r
    t = max_tile - (max_tile % 128)
    while t >= 128:
        if r % t == 0:
            return t
        t -= 128
    return r


# ---------------------------------------------------------------------------
# Kernel A: stem 1x1 conv + folded BN + LeakyReLU.
#   x: (Cin, R) bf16, pixels R = N*H*W on the lane axis  ->  (Cmid, R) bf16.
# ---------------------------------------------------------------------------
def _stem_kernel(x_ref, w_ref, s_ref, b_ref, o_ref):
    y = jnp.dot(w_ref[...], x_ref[...], preferred_element_type=jnp.float32)
    y = y * s_ref[...] + b_ref[...]
    o_ref[...] = _leaky(y).astype(o_ref.dtype)


def stem_conv_bn_lrelu(x_cr, w, scale, bias):
    cin, r = x_cr.shape
    cmid = w.shape[0]
    tr = _pick_row_tile(r)
    return pl.pallas_call(
        _stem_kernel,
        out_shape=jax.ShapeDtypeStruct((cmid, r), jnp.bfloat16),
        grid=(r // tr,),
        in_specs=[
            pl.BlockSpec((cin, tr), lambda i: (0, i)),
            pl.BlockSpec((cmid, cin), lambda i: (0, 0)),
            pl.BlockSpec((cmid, 1), lambda i: (0, 0)),
            pl.BlockSpec((cmid, 1), lambda i: (0, 0)),
        ],
        out_specs=pl.BlockSpec((cmid, tr), lambda i: (0, i)),
        compiler_params=pltpu.CompilerParams(dimension_semantics=("parallel",)),
    )(x_cr, w, scale.reshape(cmid, 1), bias.reshape(cmid, 1))


# ---------------------------------------------------------------------------
# Kernel B: one SK branch = grouped kxk conv (as one per-group matmul over
# im2col patches) + folded BN + LeakyReLU, with the per-image GAP fused into
# the epilogue.  All G groups are done inside one grid step (grid = (N,)), so
# weights / BN params stay resident across the batch.  Output blocks are
# (G, Cout/G, H*W): lane-dense, unmasked stores.
# ---------------------------------------------------------------------------
def _make_branch_kernel(g):
    def branch_kernel(p_ref, w_ref, s_ref, b_ref, o_ref, gap_ref):
        # p: (1,G,Kg,HW) bf16 ; w: (G,Cg,Kg) bf16 ; s,b: (G,Cg,1) f32
        for j in range(g):                                  # static unroll (G small)
            y = jnp.dot(w_ref[j], p_ref[0, j],
                        preferred_element_type=jnp.float32)  # (Cg, HW)
            y = y * s_ref[j] + b_ref[j]
            y = _leaky(y)
            gap_ref[0, j] = jnp.mean(y, axis=1, keepdims=True)   # fused GAP
            o_ref[0, j] = y.astype(o_ref.dtype)
    return branch_kernel


def branch_conv_bn_lrelu_gap(patches, w_g, scale, bias):
    # patches: (N, G, Kg, HW) bf16 ; w_g: (G, Cg, Kg) bf16 ; scale/bias: (Cout,) f32
    n, g, kg, hw = patches.shape
    cg = w_g.shape[1]
    return pl.pallas_call(
        _make_branch_kernel(g),
        out_shape=(jax.ShapeDtypeStruct((n, g, cg, hw), jnp.bfloat16),   # feature map
                   jax.ShapeDtypeStruct((n, g, cg, 1), jnp.float32)),    # per-image mean
        grid=(n,),
        in_specs=[
            pl.BlockSpec((1, g, kg, hw), lambda i: (i, 0, 0, 0)),
            pl.BlockSpec((g, cg, kg), lambda i: (0, 0, 0)),
            pl.BlockSpec((g, cg, 1), lambda i: (0, 0, 0)),
            pl.BlockSpec((g, cg, 1), lambda i: (0, 0, 0)),
        ],
        out_specs=(pl.BlockSpec((1, g, cg, hw), lambda i: (i, 0, 0, 0)),
                   pl.BlockSpec((1, g, cg, 1), lambda i: (i, 0, 0, 0))),
        compiler_params=pltpu.CompilerParams(dimension_semantics=("parallel",)),
    )(patches, w_g, scale.reshape(g, cg, 1), bias.reshape(g, cg, 1))


# ---------------------------------------------------------------------------
# Kernel C: batched squeeze/excite.  One step, all N images at once:
#   z = fea_s @ fc_w + fc_b ;  logits_m = z @ fcs_w[m] + fcs_b[m] ;
#   att = softmax over branches.  Tiny f32 kernel (K/N dims are a few lanes).
# ---------------------------------------------------------------------------
def _make_attn_kernel(m):
    def attn_kernel(s_ref, fcw_ref, fcb_ref, fcsw_ref, fcsb_ref, o_ref):
        z = jnp.dot(s_ref[...], fcw_ref[...],
                    preferred_element_type=jnp.float32) + fcb_ref[...]        # (N, d)
        logits = [jnp.dot(z, fcsw_ref[i], preferred_element_type=jnp.float32)
                  + fcsb_ref[i] for i in range(m)]                            # each (N, C)
        mx = logits[0]
        for i in range(1, m):
            mx = jnp.maximum(mx, logits[i])
        es = [jnp.exp(l - mx) for l in logits]
        denom = es[0]
        for i in range(1, m):
            denom = denom + es[i]
        inv = 1.0 / denom
        for i in range(m):
            o_ref[i] = (es[i] * inv).astype(o_ref.dtype)
    return attn_kernel


def sk_attention(fea_s, fc_w, fc_b, fcs_w, fcs_b):
    # fea_s: (N, C) ; fc_w: (C, d) ; fcs_w: (M, d, C) ; fcs_b: (M, C)
    n, c = fea_s.shape
    d = fc_w.shape[1]
    m = fcs_w.shape[0]
    return pl.pallas_call(
        _make_attn_kernel(m),
        out_shape=jax.ShapeDtypeStruct((m, n, c), jnp.float32),
        grid=(1,),
        in_specs=[
            pl.BlockSpec((n, c), lambda i: (0, 0)),
            pl.BlockSpec((c, d), lambda i: (0, 0)),
            pl.BlockSpec((1, d), lambda i: (0, 0)),
            pl.BlockSpec((m, d, c), lambda i: (0, 0, 0)),
            pl.BlockSpec((m, 1, c), lambda i: (0, 0, 0)),
        ],
        out_specs=pl.BlockSpec((m, n, c), lambda i: (0, 0, 0)),
        compiler_params=pltpu.CompilerParams(dimension_semantics=("arbitrary",)),
    )(fea_s, fc_w, fc_b.reshape(1, d), fcs_w, fcs_b.reshape(m, 1, c))


# ---------------------------------------------------------------------------
# Kernel D: attention-weighted mix.  The M branch maps are passed as separate
# inputs (never stacked in HBM); pure broadcast-multiply-add, row-tileable,
# lane-dense f32 output.
# ---------------------------------------------------------------------------
def _make_mix_kernel(m):
    def mix_kernel(att_ref, *rest):
        feas_refs = rest[:m]
        o_ref = rest[m]
        acc = att_ref[0, 0] * feas_refs[0][0].astype(jnp.float32)
        for i in range(1, m):
            acc = acc + att_ref[0, i] * feas_refs[i][0].astype(jnp.float32)
        o_ref[0] = acc
    return mix_kernel


def sk_attention_mix(att, feas_list):
    # att: (N, M, G, Cg, 1) f32 ; feas_list: M arrays of (N, G, Cg, HW) bf16
    n, m, g, cg, _ = att.shape
    hw = feas_list[0].shape[-1]
    thw = _pick_row_tile(hw)
    att_spec = pl.BlockSpec((1, m, g, cg, 1), lambda i, j: (i, 0, 0, 0, 0))
    fea_spec = pl.BlockSpec((1, g, cg, thw), lambda i, j: (i, 0, 0, j))
    return pl.pallas_call(
        _make_mix_kernel(m),
        out_shape=jax.ShapeDtypeStruct((n, g, cg, hw), jnp.float32),
        grid=(n, hw // thw),
        in_specs=[att_spec] + [fea_spec] * m,
        out_specs=pl.BlockSpec((1, g, cg, thw), lambda i, j: (i, 0, 0, j)),
        compiler_params=pltpu.CompilerParams(
            dimension_semantics=("parallel", "parallel")),
    )(att, *feas_list)


# ---------------------------------------------------------------------------
# Parameter construction / glue
# ---------------------------------------------------------------------------
def fold_bn(gamma, beta, mean, var, conv_bias):
    scale = gamma / jnp.sqrt(var + BN_EPS)
    bias = (conv_bias - mean) * scale + beta
    return scale, bias


def _branch_patches(t_pad, k, p_max, groups):
    # t_pad: (Cmid, N, Hp, Wp) bf16, padded once with the max halo p_max.
    # Returns im2col patches (N, G, Kg, HW) with Kg = (Cmid/G)*k*k, rows ordered
    # (channel-in-group, dy, dx) to match the weight layout below.
    cmid, n, hp, wp = t_pad.shape
    p = (k - 1) // 2
    h, w = hp - 2 * p_max, wp - 2 * p_max
    base = p_max - p
    taps = [t_pad[:, :, base + dy: base + dy + h, base + dx: base + dx + w]
            for dy in range(k) for dx in range(k)]
    pat = jnp.stack(taps, axis=1)                       # (Cmid, k*k, N, H, W)
    pat = jnp.transpose(pat, (2, 0, 1, 3, 4))           # (N, Cmid, k*k, H, W)
    cg = cmid // groups
    return pat.reshape(n, groups, cg * k * k, h * w)    # (N, G, Kg, HW)


def _branch_weight(w_oihw, groups):
    # (Cout, Cin/G, k, k) -> (G, Cout/G, (Cin/G)*k*k); column order (j, dy, dx).
    cout = w_oihw.shape[0]
    return w_oihw.reshape(groups, cout // groups, -1)


def init_params(key, in_features, out_features, M, G, r, L):
    mid = out_features // 4
    d = max(int(mid / r), L)
    keys = iter(jax.random.split(key, 64))

    def rnd(shape, s=0.1):
        return jax.random.normal(next(keys), shape, jnp.float32) * s

    params = {}
    params['stem_w'] = rnd((mid, in_features, 1, 1))
    params['stem_b'] = rnd((mid,))
    params['stem_bn'] = dict(gamma=1.0 + rnd((mid,)), beta=rnd((mid,)),
                             mean=rnd((mid,)), var=1.0 + jnp.abs(rnd((mid,))))
    params['branches'] = []
    for i in range(M):
        k = 1 + 2 * i
        params['branches'].append(dict(
            w=rnd((out_features, mid // G, k, k)),
            b=rnd((out_features,)),
            bn=dict(gamma=1.0 + rnd((out_features,)), beta=rnd((out_features,)),
                    mean=rnd((out_features,)), var=1.0 + jnp.abs(rnd((out_features,))))))
    params['fc_w'] = rnd((d, out_features))          # nn.Linear(out_features -> d)
    params['fc_b'] = rnd((d,))
    params['fcs_w'] = rnd((M, out_features, d))      # nn.Linear(d -> out_features) per branch
    params['fcs_b'] = rnd((M, out_features))
    return params, mid, d


def sk_unit_forward(params, x_nchw, M, G):
    n, cin, h, w = x_nchw.shape
    hw = h * w
    r = n * hw

    # ---- stem: 1x1 conv + BN + LeakyReLU in lane-dense (C, pixels) layout ----
    x_cr = jnp.transpose(x_nchw, (1, 0, 2, 3)).reshape(cin, r).astype(jnp.bfloat16)
    w_stem = params['stem_w'][:, :, 0, 0].astype(jnp.bfloat16)           # (Cmid, Cin)
    s_scale, s_bias = fold_bn(**params['stem_bn'], conv_bias=params['stem_b'])
    t_cr = stem_conv_bn_lrelu(x_cr, w_stem, s_scale, s_bias)             # (Cmid, R) bf16
    cmid = w_stem.shape[0]

    # ---- shared max-halo padding (done once, reused by every branch) ----
    k_max = 1 + 2 * (M - 1)
    p_max = (k_max - 1) // 2
    t_pad = jnp.pad(t_cr.reshape(cmid, n, h, w),
                    ((0, 0), (0, 0), (p_max, p_max), (p_max, p_max)))

    # ---- SK branches: grouped kxk conv + BN + LeakyReLU, GAP fused ----
    feas, gaps = [], []
    for i in range(M):
        k = 1 + 2 * i
        br = params['branches'][i]
        patches = _branch_patches(t_pad, k, p_max, G)                    # (N, G, Kg, HW)
        w_g = _branch_weight(br['w'], G).astype(jnp.bfloat16)            # (G, Cg, Kg)
        scale, bias = fold_bn(**br['bn'], conv_bias=br['b'])
        f, gp = branch_conv_bn_lrelu_gap(patches, w_g, scale, bias)
        feas.append(f)                                                   # (N, G, Cg, HW) bf16
        gaps.append(gp)                                                  # (N, G, Cg, 1) f32
    g_dim, cg = feas[0].shape[1], feas[0].shape[2]
    cout = g_dim * cg

    # ---- SK attention: batched squeeze/excite + softmax over branches ----
    fea_s = sum(gaps).reshape(n, cout)                                   # (N, Cout) f32
    att = sk_attention(fea_s, params['fc_w'].T, params['fc_b'],
                       jnp.transpose(params['fcs_w'], (0, 2, 1)), params['fcs_b'])
    att = jnp.transpose(att, (1, 0, 2)).reshape(n, M, g_dim, cg, 1)      # (N, M, G, Cg, 1)

    # ---- attention-weighted mix (branch maps never stacked in HBM) ----
    out = sk_attention_mix(att, feas)                                    # (N, G, Cg, HW) f32
    return out.reshape(n, cout, h, w)                                    # NCHW


# ---------------------------------------------------------------------------
# Pure-JAX reference (independent path via lax.conv) for validation
# ---------------------------------------------------------------------------
def reference_forward(params, x_nchw, M, G):
    def conv_bn_act(x, w, b, bn, k, groups):
        p = (k - 1) // 2
        y = jax.lax.conv_general_dilated(
            x, w, window_strides=(1, 1), padding=((p, p), (p, p)),
            dimension_numbers=('NCHW', 'OIHW', 'NCHW'),
            feature_group_count=groups)
        y = y + b[None, :, None, None]
        scale = bn['gamma'] / jnp.sqrt(bn['var'] + BN_EPS)
        y = (y - bn['mean'][None, :, None, None]) * scale[None, :, None, None] \
            + bn['beta'][None, :, None, None]
        return jnp.where(y > 0, y, LEAKY_SLOPE * y)

    t = conv_bn_act(x_nchw, params['stem_w'], params['stem_b'], params['stem_bn'], 1, 1)
    feas = [conv_bn_act(t, params['branches'][i]['w'], params['branches'][i]['b'],
                        params['branches'][i]['bn'], 1 + 2 * i, G) for i in range(M)]
    feas = jnp.stack(feas, axis=1)                    # (N, M, C, H, W)
    fea_u = jnp.sum(feas, axis=1)
    fea_s = fea_u.mean(-1).mean(-1)                   # (N, C)
    fea_z = fea_s @ params['fc_w'].T + params['fc_b']
    att = jnp.stack([fea_z @ params['fcs_w'][i].T + params['fcs_b'][i]
                     for i in range(M)], axis=1)      # (N, M, C)
    att = jax.nn.softmax(att, axis=1)
    return jnp.sum(feas * att[:, :, :, None, None], axis=1)


if __name__ == "__main__":
    N, Cin, H, W = 2, 8, 16, 16
    out_features, M, G, r, L = 16, 2, 2, 2, 4

    key = jax.random.PRNGKey(0)
    kx, kp = jax.random.split(key)
    x = jax.random.normal(kx, (N, Cin, H, W), jnp.float32)
    params, mid, d = init_params(kp, Cin, out_features, M, G, r, L)

    fwd = jax.jit(lambda p, xx: sk_unit_forward(p, xx, M, G))
    out = jax.block_until_ready(fwd(params, x))

    ref = reference_forward(params, x, M, G)
    # Tolerance reflects bf16 storage of activations/weights (f32 accumulation).
    np.testing.assert_allclose(np.asarray(out), np.asarray(ref), rtol=2e-2, atol=2e-2)
    assert out.shape == (N, out_features, H, W)
    print("KERNEL_OK")
</pallas_src>

<mosaic_0001>
module attributes {stable_mosaic.version = 11 : i64} {
  func.func @_stem_kernel(%arg0: i32, %arg1: memref<8x512xbf16, #tpu.memory_space<vmem>>, %arg2: memref<4x8xbf16, #tpu.memory_space<vmem>>, %arg3: memref<4x1xf32, #tpu.memory_space<vmem>>, %arg4: memref<4x1xf32, #tpu.memory_space<vmem>>, %arg5: memref<4x512xbf16, #tpu.memory_space<vmem>>) attributes {dimension_semantics = [#tpu.dimension_semantics<parallel>], iteration_bounds = array<i64: 1>, scalar_prefetch = 0 : i64, scratch_operands = 0 : i64, tpu.core_type = #tpu.core_type<tc>, window_params = [{transform_indices = @transform_0, window_bounds = array<i64: 8, 512>}, {pipeline_mode = #tpu.pipeline_mode<synchronous>, transform_indices = @transform_1, window_bounds = array<i64: 4, 8>}, {pipeline_mode = #tpu.pipeline_mode<synchronous>, transform_indices = @transform_2, window_bounds = array<i64: 4, 1>}, {pipeline_mode = #tpu.pipeline_mode<synchronous>, transform_indices = @transform_3, window_bounds = array<i64: 4, 1>}, {transform_indices = @transform_4, window_bounds = array<i64: 4, 512>}]} {
    %c0 = arith.constant 0 : index
    %c0_0 = arith.constant 0 : index
    %0 = vector.load %arg2[%c0, %c0_0] : memref<4x8xbf16, #tpu.memory_space<vmem>>, vector<4x8xbf16>
    %c0_1 = arith.constant 0 : index
    %c0_2 = arith.constant 0 : index
    %1 = vector.load %arg1[%c0_1, %c0_2] : memref<8x512xbf16, #tpu.memory_space<vmem>>, vector<8x512xbf16>
    %cst = arith.constant dense<0.000000e+00> : vector<4x512xf32>
    %2 = tpu.matmul %0, %1, %cst {dimension_numbers = #tpu.dot_dimension_numbers<[1], [0], [0], [1], [0, 0, 1, 1], [], []>} : vector<4x8xbf16>, vector<8x512xbf16>, vector<4x512xf32> -> vector<4x512xf32>
    %c0_3 = arith.constant 0 : index
    %c0_4 = arith.constant 0 : index
    %3 = vector.load %arg3[%c0_3, %c0_4] : memref<4x1xf32, #tpu.memory_space<vmem>>, vector<4x1xf32>
    %4 = vector.broadcast %3 : vector<4x1xf32> to vector<4x512xf32>
    %5 = arith.mulf %2, %4 : vector<4x512xf32>
    %c0_5 = arith.constant 0 : index
    %c0_6 = arith.constant 0 : index
    %6 = vector.load %arg4[%c0_5, %c0_6] : memref<4x1xf32, #tpu.memory_space<vmem>>, vector<4x1xf32>
    %7 = vector.broadcast %6 : vector<4x1xf32> to vector<4x512xf32>
    %8 = arith.addf %5, %7 : vector<4x512xf32>
    %cst_7 = arith.constant 0.000000e+00 : f32
    %9 = vector.broadcast %cst_7 : f32 to vector<4x512xf32>
    %10 = arith.cmpf ogt, %8, %9 : vector<4x512xf32>
    %cst_8 = arith.constant 2.000000e-01 : f32
    %11 = vector.broadcast %cst_8 : f32 to vector<4x512xf32>
    %12 = arith.mulf %11, %8 : vector<4x512xf32>
    %13 = arith.select %10, %8, %12 : vector<4x512xi1>, vector<4x512xf32>
    %14 = arith.truncf %13 : vector<4x512xf32> to vector<4x512xbf16>
    %c0_9 = arith.constant 0 : index
    %c0_10 = arith.constant 0 : index
    %15 = vector.load %arg5[%c0_9, %c0_10] : memref<4x512xbf16, #tpu.memory_space<vmem>>, vector<4x512xbf16>
    tpu.vector_store %arg5[%c0_9, %c0_10], %14 {strides = array<i32>} : memref<4x512xbf16, #tpu.memory_space<vmem>>, vector<4x512xbf16>,
    return
  }
  func.func @transform_0(%arg0: i32) -> (i32, i32) {
    %c0_i32 = arith.constant 0 : i32
    %c0_i32_0 = arith.constant 0 : i32
    return %c0_i32, %arg0 : i32, i32
  }
  func.func @transform_1(%arg0: i32) -> (i32, i32) {
    %c0_i32 = arith.constant 0 : i32
    %c0_i32_0 = arith.constant 0 : i32
    %c0_i32_1 = arith.constant 0 : i32
    return %c0_i32, %c0_i32_0 : i32, i32
  }
  func.func @transform_2(%arg0: i32) -> (i32, i32) {
    %c0_i32 = arith.constant 0 : i32
    %c0_i32_0 = arith.constant 0 : i32
    %c0_i32_1 = arith.constant 0 : i32
    return %c0_i32, %c0_i32_0 : i32, i32
  }
  func.func @transform_3(%arg0: i32) -> (i32, i32) {
    %c0_i32 = arith.constant 0 : i32
    %c0_i32_0 = arith.constant 0 : i32
    %c0_i32_1 = arith.constant 0 : i32
    return %c0_i32, %c0_i32_0 : i32, i32
  }
  func.func @transform_4(%arg0: i32) -> (i32, i32) {
    %c0_i32 = arith.constant 0 : i32
    %c0_i32_0 = arith.constant 0 : i32
    return %c0_i32, %arg0 : i32, i32
  }
}

module attributes {stable_mosaic.version = 11 : i64} {
  func.func @branch_kernel(%arg0: i32, %arg1: memref<1x2x18x256xbf16, #tpu.memory_space<vmem>>, %arg2: memref<2x8x18xbf16, #tpu.memory_space<vmem>>, %arg3: memref<2x8x1xf32, #tpu.memory_space<vmem>>, %arg4: memref<2x8x1xf32, #tpu.memory_space<vmem>>, %arg5: memref<1x2x8x256xbf16, #tpu.memory_space<vmem>>, %arg6: memref<1x2x8x1xf32, #tpu.memory_space<vmem>>) attributes {dimension_semantics = [#tpu.dimension_semantics<parallel>], iteration_bounds = array<i64: 2>, scalar_prefetch = 0 : i64, scratch_operands = 0 : i64, tpu.core_type = #tpu.core_type<tc>, window_params = [{transform_indices = @transform_0, window_bounds = array<i64: 1, 2, 18, 256>}, {pipeline_mode = #tpu.pipeline_mode<synchronous>, transform_indices = @transform_1, window_bounds = array<i64: 2, 8, 18>}, {pipeline_mode = #tpu.pipeline_mode<synchronous>, transform_indices = @transform_2, window_bounds = array<i64: 2, 8, 1>}, {pipeline_mode = #tpu.pipeline_mode<synchronous>, transform_indices = @transform_3, window_bounds = array<i64: 2, 8, 1>}, {transform_indices = @transform_4, window_bounds = array<i64: 1, 2, 8, 256>}, {transform_indices = @transform_5, window_bounds = array<i64: 1, 2, 8, 1>}]} {
    %c0 = arith.constant 0 : index
    %c0_0 = arith.constant 0 : index
    %c0_1 = arith.constant 0 : index
    %0 = vector.load %arg2[%c0, %c0_0, %c0_1] : memref<2x8x18xbf16, #tpu.memory_space<vmem>>, vector<1x8x18xbf16>
    %1 = vector.shape_cast %0 : vector<1x8x18xbf16> to vector<8x18xbf16>
    %c0_2 = arith.constant 0 : index
    %c0_3 = arith.constant 0 : index
    %c0_4 = arith.constant 0 : index
    %c0_5 = arith.constant 0 : index
    %2 = vector.load %arg1[%c0_2, %c0_3, %c0_4, %c0_5] : memref<1x2x18x256xbf16, #tpu.memory_space<vmem>>, vector<1x1x18x256xbf16>
    %3 = vector.shape_cast %2 : vector<1x1x18x256xbf16> to vector<18x256xbf16>
    %cst = arith.constant dense<0.000000e+00> : vector<8x256xf32>
    %4 = tpu.matmul %1, %3, %cst {dimension_numbers = #tpu.dot_dimension_numbers<[1], [0], [0], [1], [0, 0, 1, 1], [], []>} : vector<8x18xbf16>, vector<18x256xbf16>, vector<8x256xf32> -> vector<8x256xf32>
    %c0_6 = arith.constant 0 : index
    %c0_7 = arith.constant 0 : index
    %c0_8 = arith.constant 0 : index
    %5 = vector.load %arg3[%c0_6, %c0_7, %c0_8] : memref<2x8x1xf32, #tpu.memory_space<vmem>>, vector<1x8x1xf32>
    %6 = vector.shape_cast %5 : vector<1x8x1xf32> to vector<8x1xf32>
    %7 = vector.broadcast %6 : vector<8x1xf32> to vector<8x256xf32>
    %8 = arith.mulf %4, %7 : vector<8x256xf32>
    %c0_9 = arith.constant 0 : index
    %c0_10 = arith.constant 0 : index
    %c0_11 = arith.constant 0 : index
    %9 = vector.load %arg4[%c0_9, %c0_10, %c0_11] : memref<2x8x1xf32, #tpu.memory_space<vmem>>, vector<1x8x1xf32>
    %10 = vector.shape_cast %9 : vector<1x8x1xf32> to vector<8x1xf32>
    %11 = vector.broadcast %10 : vector<8x1xf32> to vector<8x256xf32>
    %12 = arith.addf %8, %11 : vector<8x256xf32>
    %cst_12 = arith.constant 0.000000e+00 : f32
    %13 = vector.broadcast %cst_12 : f32 to vector<8x256xf32>
    %14 = arith.cmpf ogt, %12, %13 : vector<8x256xf32>
    %cst_13 = arith.constant 2.000000e-01 : f32
    %15 = vector.broadcast %cst_13 : f32 to vector<8x256xf32>
    %16 = arith.mulf %15, %12 : vector<8x256xf32>
    %17 = arith.select %14, %12, %16 : vector<8x256xi1>, vector<8x256xf32>
    %cst_14 = arith.constant dense<0.000000e+00> : vector<8xf32>
    %18 = vector.multi_reduction <add>, %17, %cst_14 [1] : vector<8x256xf32> to vector<8xf32>
    %19 = vector.shape_cast %18 : vector<8xf32> to vector<8x1xf32>
    %cst_15 = arith.constant 2.560000e+02 : f32
    %20 = vector.broadcast %cst_15 : f32 to vector<8x1xf32>
    %21 = arith.divf %19, %20 : vector<8x1xf32>
    %c0_16 = arith.constant 0 : index
    %c0_17 = arith.constant 0 : index
    %c0_18 = arith.constant 0 : index
    %c0_19 = arith.constant 0 : index
    %22 = vector.load %arg6[%c0_16, %c0_17, %c0_18, %c0_19] : memref<1x2x8x1xf32, #tpu.memory_space<vmem>>, vector<1x1x8x1xf32>
    %23 = vector.shape_cast %22 : vector<1x1x8x1xf32> to vector<8x1xf32>
    %24 = vector.shape_cast %21 : vector<8x1xf32> to vector<1x1x8x1xf32>
    tpu.vector_store %arg6[%c0_16, %c0_17, %c0_18, %c0_19], %24 {strides = array<i32>} : memref<1x2x8x1xf32, #tpu.memory_space<vmem>>, vector<1x1x8x1xf32>,
    %25 = arith.truncf %17 : vector<8x256xf32> to vector<8x256xbf16>
    %c0_20 = arith.constant 0 : index
    %c0_21 = arith.constant 0 : index
    %c0_22 = arith.constant 0 : index
    %c0_23 = arith.constant 0 : index
    %26 = vector.load %arg5[%c0_20, %c0_21, %c0_22, %c0_23] : memref<1x2x8x256xbf16, #tpu.memory_space<vmem>>, vector<1x1x8x256xbf16>
    %27 = vector.shape_cast %26 : vector<1x1x8x256xbf16> to vector<8x256xbf16>
    %28 = vector.shape_cast %25 : vector<8x256xbf16> to vector<1x1x8x256xbf16>
    tpu.vector_store %arg5[%c0_20, %c0_21, %c0_22, %c0_23], %28 {strides = array<i32>} : memref<1x2x8x256xbf16, #tpu.memory_space<vmem>>, vector<1x1x8x256xbf16>,
    %c1 = arith.constant 1 : index
    %c0_24 = arith.constant 0 : index
    %c0_25 = arith.constant 0 : index
    %29 = vector.load %arg2[%c1, %c0_24, %c0_25] : memref<2x8x18xbf16, #tpu.memory_space<vmem>>, vector<1x8x18xbf16>
    %30 = vector.shape_cast %29 : vector<1x8x18xbf16> to vector<8x18xbf16>
    %c0_26 = arith.constant 0 : index
    %c1_27 = arith.constant 1 : index
    %c0_28 = arith.constant 0 : index
    %c0_29 = arith.constant 0 : index
    %31 = vector.load %arg1[%c0_26, %c1_27, %c0_28, %c0_29] : memref<1x2x18x256xbf16, #tpu.memory_space<vmem>>, vector<1x1x18x256xbf16>
    %32 = vector.shape_cast %31 : vector<1x1x18x256xbf16> to vector<18x256xbf16>
    %cst_30 = arith.constant dense<0.000000e+00> : vector<8x256xf32>
    %33 = tpu.matmul %30, %32, %cst_30 {dimension_numbers = #tpu.dot_dimension_numbers<[1], [0], [0], [1], [0, 0, 1, 1], [], []>} : vector<8x18xbf16>, vector<18x256xbf16>, vector<8x256xf32> -> vector<8x256xf32>
    %c1_31 = arith.constant 1 : index
    %c0_32 = arith.constant 0 : index
    %c0_33 = arith.constant 0 : index
    %34 = vector.load %arg3[%c1_31, %c0_32, %c0_33] : memref<2x8x1xf32, #tpu.memory_space<vmem>>, vector<1x8x1xf32>
    %35 = vector.shape_cast %34 : vector<1x8x1xf32> to vector<8x1xf32>
    %36 = vector.broadcast %35 : vector<8x1xf32> to vector<8x256xf32>
    %37 = arith.mulf %33, %36 : vector<8x256xf32>
    %c1_34 = arith.constant 1 : index
    %c0_35 = arith.constant 0 : index
    %c0_36 = arith.constant 0 : index
    %38 = vector.load %arg4[%c1_34, %c0_35, %c0_36] : memref<2x8x1xf32, #tpu.memory_space<vmem>>, vector<1x8x1xf32>
    %39 = vector.shape_cast %38 : vector<1x8x1xf32> to vector<8x1xf32>
    %40 = vector.broadcast %39 : vector<8x1xf32> to vector<8x256xf32>
    %41 = arith.addf %37, %40 : vector<8x256xf32>
    %cst_37 = arith.constant 0.000000e+00 : f32
    %42 = vector.broadcast %cst_37 : f32 to vector<8x256xf32>
    %43 = arith.cmpf ogt, %41, %42 : vector<8x256xf32>
    %cst_38 = arith.constant 2.000000e-01 : f32
    %44 = vector.broadcast %cst_38 : f32 to vector<8x256xf32>
    %45 = arith.mulf %44, %41 : vector<8x256xf32>
    %46 = arith.select %43, %41, %45 : vector<8x256xi1>, vector<8x256xf32>
    %cst_39 = arith.constant dense<0.000000e+00> : vector<8xf32>
    %47 = vector.multi_reduction <add>, %46, %cst_39 [1] : vector<8x256xf32> to vector<8xf32>
    %48 = vector.shape_cast %47 : vector<8xf32> to vector<8x1xf32>
    %cst_40 = arith.constant 2.560000e+02 : f32
    %49 = vector.broadcast %cst_40 : f32 to vector<8x1xf32>
    %50 = arith.divf %48, %49 : vector<8x1xf32>
    %c0_41 = arith.constant 0 : index
    %c1_42 = arith.constant 1 : index
    %c0_43 = arith.constant 0 : index
    %c0_44 = arith.constant 0 : index
    %51 = vector.load %arg6[%c0_41, %c1_42, %c0_43, %c0_44] : memref<1x2x8x1xf32, #tpu.memory_space<vmem>>, vector<1x1x8x1xf32>
    %52 = vector.shape_cast %51 : vector<1x1x8x1xf32> to vector<8x1xf32>
    %53 = vector.shape_cast %50 : vector<8x1xf32> to vector<1x1x8x1xf32>
    tpu.vector_store %arg6[%c0_41, %c1_42, %c0_43, %c0_44], %53 {strides = array<i32>} : memref<1x2x8x1xf32, #tpu.memory_space<vmem>>, vector<1x1x8x1xf32>,
    %54 = arith.truncf %46 : vector<8x256xf32> to vector<8x256xbf16>
    %c0_45 = arith.constant 0 : index
    %c1_46 = arith.constant 1 : index
    %c0_47 = arith.constant 0 : index
    %c0_48 = arith.constant 0 : index
    %55 = vector.load %arg5[%c0_45, %c1_46, %c0_47, %c0_48] : memref<1x2x8x256xbf16, #tpu.memory_space<vmem>>, vector<1x1x8x256xbf16>
    %56 = vector.shape_cast %55 : vector<1x1x8x256xbf16> to vector<8x256xbf16>
    %57 = vector.shape_cast %54 : vector<8x256xbf16> to vector<1x1x8x256xbf16>
    tpu.vector_store %arg5[%c0_45, %c1_46, %c0_47, %c0_48], %57 {strides = array<i32>} : memref<1x2x8x256xbf16, #tpu.memory_space<vmem>>, vector<1x1x8x256xbf16>,
    return
  }
  func.func @transform_0(%arg0: i32) -> (i32, i32, i32, i32) {
    %c0_i32 = arith.constant 0 : i32
    %c0_i32_0 = arith.constant 0 : i32
    %c0_i32_1 = arith.constant 0 : i32
    %c0_i32_2 = arith.constant 0 : i32
    return %arg0, %c0_i32, %c0_i32_0, %c0_i32_1 : i32, i32, i32, i32
  }
  func.func @transform_1(%arg0: i32) -> (i32, i32, i32) {
    %c0_i32 = arith.constant 0 : i32
    %c0_i32_0 = arith.constant 0 : i32
    %c0_i32_1 = arith.constant 0 : i32
    %c0_i32_2 = arith.constant 0 : i32
    return %c0_i32, %c0_i32_0, %c0_i32_1 : i32, i32, i32
  }
  func.func @transform_2(%arg0: i32) -> (i32, i32, i32) {
    %c0_i32 = arith.constant 0 : i32
    %c0_i32_0 = arith.constant 0 : i32
    %c0_i32_1 = arith.constant 0 : i32
    %c0_i32_2 = arith.constant 0 : i32
    return %c0_i32, %c0_i32_0, %c0_i32_1 : i32, i32, i32
  }
  func.func @transform_3(%arg0: i32) -> (i32, i32, i32) {
    %c0_i32 = arith.constant 0 : i32
    %c0_i32_0 = arith.constant 0 : i32
    %c0_i32_1 = arith.constant 0 : i32
    %c0_i32_2 = arith.constant 0 : i32
    return %c0_i32, %c0_i32_0, %c0_i32_1 : i32, i32, i32
  }
  func.func @transform_4(%arg0: i32) -> (i32, i32, i32, i32) {
    %c0_i32 = arith.constant 0 : i32
    %c0_i32_0 = arith.constant 0 : i32
    %c0_i32_1 = arith.constant 0 : i32
    %c0_i32_2 = arith.constant 0 : i32
    return %arg0, %c0_i32, %c0_i32_0, %c0_i32_1 : i32, i32, i32, i32
  }
  func.func @transform_5(%arg0: i32) -> (i32, i32, i32, i32) {
    %c0_i32 = arith.constant 0 : i32
    %c0_i32_0 = arith.constant 0 : i32
    %c0_i32_1 = arith.constant 0 : i32
    %c0_i32_2 = arith.constant 0 : i32
    return %arg0, %c0_i32, %c0_i32_0, %c0_i32_1 : i32, i32, i32, i32
  }
}

module attributes {stable_mosaic.version = 11 : i64} {
  func.func @branch_kernel(%arg0: i32, %arg1: memref<1x2x2x256xbf16, #tpu.memory_space<vmem>>, %arg2: memref<2x8x2xbf16, #tpu.memory_space<vmem>>, %arg3: memref<2x8x1xf32, #tpu.memory_space<vmem>>, %arg4: memref<2x8x1xf32, #tpu.memory_space<vmem>>, %arg5: memref<1x2x8x256xbf16, #tpu.memory_space<vmem>>, %arg6: memref<1x2x8x1xf32, #tpu.memory_space<vmem>>) attributes {dimension_semantics = [#tpu.dimension_semantics<parallel>], iteration_bounds = array<i64: 2>, scalar_prefetch = 0 : i64, scratch_operands = 0 : i64, tpu.core_type = #tpu.core_type<tc>, window_params = [{transform_indices = @transform_0, window_bounds = array<i64: 1, 2, 2, 256>}, {pipeline_mode = #tpu.pipeline_mode<synchronous>, transform_indices = @transform_1, window_bounds = array<i64: 2, 8, 2>}, {pipeline_mode = #tpu.pipeline_mode<synchronous>, transform_indices = @transform_2, window_bounds = array<i64: 2, 8, 1>}, {pipeline_mode = #tpu.pipeline_mode<synchronous>, transform_indices = @transform_3, window_bounds = array<i64: 2, 8, 1>}, {transform_indices = @transform_4, window_bounds = array<i64: 1, 2, 8, 256>}, {transform_indices = @transform_5, window_bounds = array<i64: 1, 2, 8, 1>}]} {
    %c0 = arith.constant 0 : index
    %c0_0 = arith.constant 0 : index
    %c0_1 = arith.constant 0 : index
    %0 = vector.load %arg2[%c0, %c0_0, %c0_1] : memref<2x8x2xbf16, #tpu.memory_space<vmem>>, vector<1x8x2xbf16>
    %1 = vector.shape_cast %0 : vector<1x8x2xbf16> to vector<8x2xbf16>
    %c0_2 = arith.constant 0 : index
    %c0_3 = arith.constant 0 : index
    %c0_4 = arith.constant 0 : index
    %c0_5 = arith.constant 0 : index
    %2 = vector.load %arg1[%c0_2, %c0_3, %c0_4, %c0_5] : memref<1x2x2x256xbf16, #tpu.memory_space<vmem>>, vector<1x1x2x256xbf16>
    %3 = vector.shape_cast %2 : vector<1x1x2x256xbf16> to vector<2x256xbf16>
    %cst = arith.constant dense<0.000000e+00> : vector<8x256xf32>
    %4 = tpu.matmul %1, %3, %cst {dimension_numbers = #tpu.dot_dimension_numbers<[1], [0], [0], [1], [0, 0, 1, 1], [], []>} : vector<8x2xbf16>, vector<2x256xbf16>, vector<8x256xf32> -> vector<8x256xf32>
    %c0_6 = arith.constant 0 : index
    %c0_7 = arith.constant 0 : index
    %c0_8 = arith.constant 0 : index
    %5 = vector.load %arg3[%c0_6, %c0_7, %c0_8] : memref<2x8x1xf32, #tpu.memory_space<vmem>>, vector<1x8x1xf32>
    %6 = vector.shape_cast %5 : vector<1x8x1xf32> to vector<8x1xf32>
    %7 = vector.broadcast %6 : vector<8x1xf32> to vector<8x256xf32>
    %8 = arith.mulf %4, %7 : vector<8x256xf32>
    %c0_9 = arith.constant 0 : index
    %c0_10 = arith.constant 0 : index
    %c0_11 = arith.constant 0 : index
    %9 = vector.load %arg4[%c0_9, %c0_10, %c0_11] : memref<2x8x1xf32, #tpu.memory_space<vmem>>, vector<1x8x1xf32>
    %10 = vector.shape_cast %9 : vector<1x8x1xf32> to vector<8x1xf32>
    %11 = vector.broadcast %10 : vector<8x1xf32> to vector<8x256xf32>
    %12 = arith.addf %8, %11 : vector<8x256xf32>
    %cst_12 = arith.constant 0.000000e+00 : f32
    %13 = vector.broadcast %cst_12 : f32 to vector<8x256xf32>
    %14 = arith.cmpf ogt, %12, %13 : vector<8x256xf32>
    %cst_13 = arith.constant 2.000000e-01 : f32
    %15 = vector.broadcast %cst_13 : f32 to vector<8x256xf32>
    %16 = arith.mulf %15, %12 : vector<8x256xf32>
    %17 = arith.select %14, %12, %16 : vector<8x256xi1>, vector<8x256xf32>
    %cst_14 = arith.constant dense<0.000000e+00> : vector<8xf32>
    %18 = vector.multi_reduction <add>, %17, %cst_14 [1] : vector<8x256xf32> to vector<8xf32>
    %19 = vector.shape_cast %18 : vector<8xf32> to vector<8x1xf32>
    %cst_15 = arith.constant 2.560000e+02 : f32
    %20 = vector.broadcast %cst_15 : f32 to vector<8x1xf32>
    %21 = arith.divf %19, %20 : vector<8x1xf32>
    %c0_16 = arith.constant 0 : index
    %c0_17 = arith.constant 0 : index
    %c0_18 = arith.constant 0 : index
    %c0_19 = arith.constant 0 : index
    %22 = vector.load %arg6[%c0_16, %c0_17, %c0_18, %c0_19] : memref<1x2x8x1xf32, #tpu.memory_space<vmem>>, vector<1x1x8x1xf32>
    %23 = vector.shape_cast %22 : vector<1x1x8x1xf32> to vector<8x1xf32>
    %24 = vector.shape_cast %21 : vector<8x1xf32> to vector<1x1x8x1xf32>
    tpu.vector_store %arg6[%c0_16, %c0_17, %c0_18, %c0_19], %24 {strides = array<i32>} : memref<1x2x8x1xf32, #tpu.memory_space<vmem>>, vector<1x1x8x1xf32>,
    %25 = arith.truncf %17 : vector<8x256xf32> to vector<8x256xbf16>
    %c0_20 = arith.constant 0 : index
    %c0_21 = arith.constant 0 : index
    %c0_22 = arith.constant 0 : index
    %c0_23 = arith.constant 0 : index
    %26 = vector.load %arg5[%c0_20, %c0_21, %c0_22, %c0_23] : memref<1x2x8x256xbf16, #tpu.memory_space<vmem>>, vector<1x1x8x256xbf16>
    %27 = vector.shape_cast %26 : vector<1x1x8x256xbf16> to vector<8x256xbf16>
    %28 = vector.shape_cast %25 : vector<8x256xbf16> to vector<1x1x8x256xbf16>
    tpu.vector_store %arg5[%c0_20, %c0_21, %c0_22, %c0_23], %28 {strides = array<i32>} : memref<1x2x8x256xbf16, #tpu.memory_space<vmem>>, vector<1x1x8x256xbf16>,
    %c1 = arith.constant 1 : index
    %c0_24 = arith.constant 0 : index
    %c0_25 = arith.constant 0 : index
    %29 = vector.load %arg2[%c1, %c0_24, %c0_25] : memref<2x8x2xbf16, #tpu.memory_space<vmem>>, vector<1x8x2xbf16>
    %30 = vector.shape_cast %29 : vector<1x8x2xbf16> to vector<8x2xbf16>
    %c0_26 = arith.constant 0 : index
    %c1_27 = arith.constant 1 : index
    %c0_28 = arith.constant 0 : index
    %c0_29 = arith.constant 0 : index
    %31 = vector.load %arg1[%c0_26, %c1_27, %c0_28, %c0_29] : memref<1x2x2x256xbf16, #tpu.memory_space<vmem>>, vector<1x1x2x256xbf16>
    %32 = vector.shape_cast %31 : vector<1x1x2x256xbf16> to vector<2x256xbf16>
    %cst_30 = arith.constant dense<0.000000e+00> : vector<8x256xf32>
    %33 = tpu.matmul %30, %32, %cst_30 {dimension_numbers = #tpu.dot_dimension_numbers<[1], [0], [0], [1], [0, 0, 1, 1], [], []>} : vector<8x2xbf16>, vector<2x256xbf16>, vector<8x256xf32> -> vector<8x256xf32>
    %c1_31 = arith.constant 1 : index
    %c0_32 = arith.constant 0 : index
    %c0_33 = arith.constant 0 : index
    %34 = vector.load %arg3[%c1_31, %c0_32, %c0_33] : memref<2x8x1xf32, #tpu.memory_space<vmem>>, vector<1x8x1xf32>
    %35 = vector.shape_cast %34 : vector<1x8x1xf32> to vector<8x1xf32>
    %36 = vector.broadcast %35 : vector<8x1xf32> to vector<8x256xf32>
    %37 = arith.mulf %33, %36 : vector<8x256xf32>
    %c1_34 = arith.constant 1 : index
    %c0_35 = arith.constant 0 : index
    %c0_36 = arith.constant 0 : index
    %38 = vector.load %arg4[%c1_34, %c0_35, %c0_36] : memref<2x8x1xf32, #tpu.memory_space<vmem>>, vector<1x8x1xf32>
    %39 = vector.shape_cast %38 : vector<1x8x1xf32> to vector<8x1xf32>
    %40 = vector.broadcast %39 : vector<8x1xf32> to vector<8x256xf32>
    %41 = arith.addf %37, %40 : vector<8x256xf32>
    %cst_37 = arith.constant 0.000000e+00 : f32
    %42 = vector.broadcast %cst_37 : f32 to vector<8x256xf32>
    %43 = arith.cmpf ogt, %41, %42 : vector<8x256xf32>
    %cst_38 = arith.constant 2.000000e-01 : f32
    %44 = vector.broadcast %cst_38 : f32 to vector<8x256xf32>
    %45 = arith.mulf %44, %41 : vector<8x256xf32>
    %46 = arith.select %43, %41, %45 : vector<8x256xi1>, vector<8x256xf32>
    %cst_39 = arith.constant dense<0.000000e+00> : vector<8xf32>
    %47 = vector.multi_reduction <add>, %46, %cst_39 [1] : vector<8x256xf32> to vector<8xf32>
    %48 = vector.shape_cast %47 : vector<8xf32> to vector<8x1xf32>
    %cst_40 = arith.constant 2.560000e+02 : f32
    %49 = vector.broadcast %cst_40 : f32 to vector<8x1xf32>
    %50 = arith.divf %48, %49 : vector<8x1xf32>
    %c0_41 = arith.constant 0 : index
    %c1_42 = arith.constant 1 : index
    %c0_43 = arith.constant 0 : index
    %c0_44 = arith.constant 0 : index
    %51 = vector.load %arg6[%c0_41, %c1_42, %c0_43, %c0_44] : memref<1x2x8x1xf32, #tpu.memory_space<vmem>>, vector<1x1x8x1xf32>
    %52 = vector.shape_cast %51 : vector<1x1x8x1xf32> to vector<8x1xf32>
    %53 = vector.shape_cast %50 : vector<8x1xf32> to vector<1x1x8x1xf32>
    tpu.vector_store %arg6[%c0_41, %c1_42, %c0_43, %c0_44], %53 {strides = array<i32>} : memref<1x2x8x1xf32, #tpu.memory_space<vmem>>, vector<1x1x8x1xf32>,
    %54 = arith.truncf %46 : vector<8x256xf32> to vector<8x256xbf16>
    %c0_45 = arith.constant 0 : index
    %c1_46 = arith.constant 1 : index
    %c0_47 = arith.constant 0 : index
    %c0_48 = arith.constant 0 : index
    %55 = vector.load %arg5[%c0_45, %c1_46, %c0_47, %c0_48] : memref<1x2x8x256xbf16, #tpu.memory_space<vmem>>, vector<1x1x8x256xbf16>
    %56 = vector.shape_cast %55 : vector<1x1x8x256xbf16> to vector<8x256xbf16>
    %57 = vector.shape_cast %54 : vector<8x256xbf16> to vector<1x1x8x256xbf16>
    tpu.vector_store %arg5[%c0_45, %c1_46, %c0_47, %c0_48], %57 {strides = array<i32>} : memref<1x2x8x256xbf16, #tpu.memory_space<vmem>>, vector<1x1x8x256xbf16>,
    return
  }
  func.func @transform_0(%arg0: i32) -> (i32, i32, i32, i32) {
    %c0_i32 = arith.constant 0 : i32
    %c0_i32_0 = arith.constant 0 : i32
    %c0_i32_1 = arith.constant 0 : i32
    %c0_i32_2 = arith.constant 0 : i32
    return %arg0, %c0_i32, %c0_i32_0, %c0_i32_1 : i32, i32, i32, i32
  }
  func.func @transform_1(%arg0: i32) -> (i32, i32, i32) {
    %c0_i32 = arith.constant 0 : i32
    %c0_i32_0 = arith.constant 0 : i32
    %c0_i32_1 = arith.constant 0 : i32
    %c0_i32_2 = arith.constant 0 : i32
    return %c0_i32, %c0_i32_0, %c0_i32_1 : i32, i32, i32
  }
  func.func @transform_2(%arg0: i32) -> (i32, i32, i32) {
    %c0_i32 = arith.constant 0 : i32
    %c0_i32_0 = arith.constant 0 : i32
    %c0_i32_1 = arith.constant 0 : i32
    %c0_i32_2 = arith.constant 0 : i32
    return %c0_i32, %c0_i32_0, %c0_i32_1 : i32, i32, i32
  }
  func.func @transform_3(%arg0: i32) -> (i32, i32, i32) {
    %c0_i32 = arith.constant 0 : i32
    %c0_i32_0 = arith.constant 0 : i32
    %c0_i32_1 = arith.constant 0 : i32
    %c0_i32_2 = arith.constant 0 : i32
    return %c0_i32, %c0_i32_0, %c0_i32_1 : i32, i32, i32
  }
  func.func @transform_4(%arg0: i32) -> (i32, i32, i32, i32) {
    %c0_i32 = arith.constant 0 : i32
    %c0_i32_0 = arith.constant 0 : i32
    %c0_i32_1 = arith.constant 0 : i32
    %c0_i32_2 = arith.constant 0 : i32
    return %arg0, %c0_i32, %c0_i32_0, %c0_i32_1 : i32, i32, i32, i32
  }
  func.func @transform_5(%arg0: i32) -> (i32, i32, i32, i32) {
    %c0_i32 = arith.constant 0 : i32
    %c0_i32_0 = arith.constant 0 : i32
    %c0_i32_1 = arith.constant 0 : i32
    %c0_i32_2 = arith.constant 0 : i32
    return %arg0, %c0_i32, %c0_i32_0, %c0_i32_1 : i32, i32, i32, i32
  }
}

module attributes {stable_mosaic.version = 11 : i64} {
  func.func @attn_kernel(%arg0: i32, %arg1: memref<2x16xf32, #tpu.memory_space<vmem>>, %arg2: memref<16x4xf32, #tpu.memory_space<vmem>>, %arg3: memref<1x4xf32, #tpu.memory_space<vmem>>, %arg4: memref<2x4x16xf32, #tpu.memory_space<vmem>>, %arg5: memref<2x1x16xf32, #tpu.memory_space<vmem>>, %arg6: memref<2x2x16xf32, #tpu.memory_space<vmem>>) attributes {dimension_semantics = [#tpu.dimension_semantics<arbitrary>], iteration_bounds = array<i64: 1>, scalar_prefetch = 0 : i64, scratch_operands = 0 : i64, tpu.core_type = #tpu.core_type<tc>, window_params = [{pipeline_mode = #tpu.pipeline_mode<synchronous>, transform_indices = @transform_0, window_bounds = array<i64: 2, 16>}, {pipeline_mode = #tpu.pipeline_mode<synchronous>, transform_indices = @transform_1, window_bounds = array<i64: 16, 4>}, {pipeline_mode = #tpu.pipeline_mode<synchronous>, transform_indices = @transform_2, window_bounds = array<i64: 1, 4>}, {pipeline_mode = #tpu.pipeline_mode<synchronous>, transform_indices = @transform_3, window_bounds = array<i64: 2, 4, 16>}, {pipeline_mode = #tpu.pipeline_mode<synchronous>, transform_indices = @transform_4, window_bounds = array<i64: 2, 1, 16>}, {pipeline_mode = #tpu.pipeline_mode<synchronous>, transform_indices = @transform_5, window_bounds = array<i64: 2, 2, 16>}]} {
    %c0 = arith.constant 0 : index
    %c0_0 = arith.constant 0 : index
    %0 = vector.load %arg1[%c0, %c0_0] : memref<2x16xf32, #tpu.memory_space<vmem>>, vector<2x16xf32>
    %c0_1 = arith.constant 0 : index
    %c0_2 = arith.constant 0 : index
    %1 = vector.load %arg2[%c0_1, %c0_2] : memref<16x4xf32, #tpu.memory_space<vmem>>, vector<16x4xf32>
    %cst = arith.constant dense<0.000000e+00> : vector<2x4xf32>
    %2 = tpu.matmul %0, %1, %cst {dimension_numbers = #tpu.dot_dimension_numbers<[1], [0], [0], [1], [0, 0, 1, 1], [], []>} : vector<2x16xf32>, vector<16x4xf32>, vector<2x4xf32> -> vector<2x4xf32>
    %c0_3 = arith.constant 0 : index
    %c0_4 = arith.constant 0 : index
    %3 = vector.load %arg3[%c0_3, %c0_4] : memref<1x4xf32, #tpu.memory_space<vmem>>, vector<1x4xf32>
    %4 = vector.broadcast %3 : vector<1x4xf32> to vector<2x4xf32>
    %5 = arith.addf %2, %4 : vector<2x4xf32>
    %c0_5 = arith.constant 0 : index
    %c0_6 = arith.constant 0 : index
    %c0_7 = arith.constant 0 : index
    %6 = vector.load %arg4[%c0_5, %c0_6, %c0_7] : memref<2x4x16xf32, #tpu.memory_space<vmem>>, vector<1x4x16xf32>
    %7 = vector.shape_cast %6 : vector<1x4x16xf32> to vector<4x16xf32>
    %cst_8 = arith.constant dense<0.000000e+00> : vector<2x16xf32>
    %8 = tpu.matmul %5, %7, %cst_8 {dimension_numbers = #tpu.dot_dimension_numbers<[1], [0], [0], [1], [0, 0, 1, 1], [], []>} : vector<2x4xf32>, vector<4x16xf32>, vector<2x16xf32> -> vector<2x16xf32>
    %c0_9 = arith.constant 0 : index
    %c0_10 = arith.constant 0 : index
    %c0_11 = arith.constant 0 : index
    %9 = vector.load %arg5[%c0_9, %c0_10, %c0_11] : memref<2x1x16xf32, #tpu.memory_space<vmem>>, vector<1x1x16xf32>
    %10 = vector.shape_cast %9 : vector<1x1x16xf32> to vector<1x16xf32>
    %11 = vector.broadcast %10 : vector<1x16xf32> to vector<2x16xf32>
    %12 = arith.addf %8, %11 : vector<2x16xf32>
    %c1 = arith.constant 1 : index
    %c0_12 = arith.constant 0 : index
    %c0_13 = arith.constant 0 : index
    %13 = vector.load %arg4[%c1, %c0_12, %c0_13] : memref<2x4x16xf32, #tpu.memory_space<vmem>>, vector<1x4x16xf32>
    %14 = vector.shape_cast %13 : vector<1x4x16xf32> to vector<4x16xf32>
    %cst_14 = arith.constant dense<0.000000e+00> : vector<2x16xf32>
    %15 = tpu.matmul %5, %14, %cst_14 {dimension_numbers = #tpu.dot_dimension_numbers<[1], [0], [0], [1], [0, 0, 1, 1], [], []>} : vector<2x4xf32>, vector<4x16xf32>, vector<2x16xf32> -> vector<2x16xf32>
    %c1_15 = arith.constant 1 : index
    %c0_16 = arith.constant 0 : index
    %c0_17 = arith.constant 0 : index
    %16 = vector.load %arg5[%c1_15, %c0_16, %c0_17] : memref<2x1x16xf32, #tpu.memory_space<vmem>>, vector<1x1x16xf32>
    %17 = vector.shape_cast %16 : vector<1x1x16xf32> to vector<1x16xf32>
    %18 = vector.broadcast %17 : vector<1x16xf32> to vector<2x16xf32>
    %19 = arith.addf %15, %18 : vector<2x16xf32>
    %20 = arith.maximumf %12, %19 : vector<2x16xf32>
    %21 = arith.subf %12, %20 : vector<2x16xf32>
    %22 = math.exp %21 : vector<2x16xf32>
    %23 = arith.subf %19, %20 : vector<2x16xf32>
    %24 = math.exp %23 : vector<2x16xf32>
    %25 = arith.addf %22, %24 : vector<2x16xf32>
    %cst_18 = arith.constant 1.000000e+00 : f32
    %26 = vector.broadcast %cst_18 : f32 to vector<2x16xf32>
    %27 = arith.divf %26, %25 : vector<2x16xf32>
    %28 = arith.mulf %22, %27 : vector<2x16xf32>
    %c0_19 = arith.constant 0 : index
    %c0_20 = arith.constant 0 : index
    %c0_21 = arith.constant 0 : index
    %29 = vector.load %arg6[%c0_19, %c0_20, %c0_21] : memref<2x2x16xf32, #tpu.memory_space<vmem>>, vector<1x2x16xf32>
    %30 = vector.shape_cast %29 : vector<1x2x16xf32> to vector<2x16xf32>
    %31 = vector.shape_cast %28 : vector<2x16xf32> to vector<1x2x16xf32>
    tpu.vector_store %arg6[%c0_19, %c0_20, %c0_21], %31 {strides = array<i32>} : memref<2x2x16xf32, #tpu.memory_space<vmem>>, vector<1x2x16xf32>,
    %32 = arith.mulf %24, %27 : vector<2x16xf32>
    %c1_22 = arith.constant 1 : index
    %c0_23 = arith.constant 0 : index
    %c0_24 = arith.constant 0 : index
    %33 = vector.load %arg6[%c1_22, %c0_23, %c0_24] : memref<2x2x16xf32, #tpu.memory_space<vmem>>, vector<1x2x16xf32>
    %34 = vector.shape_cast %33 : vector<1x2x16xf32> to vector<2x16xf32>
    %35 = vector.shape_cast %32 : vector<2x16xf32> to vector<1x2x16xf32>
    tpu.vector_store %arg6[%c1_22, %c0_23, %c0_24], %35 {strides = array<i32>} : memref<2x2x16xf32, #tpu.memory_space<vmem>>, vector<1x2x16xf32>,
    return
  }
  func.func @transform_0(%arg0: i32) -> (i32, i32) {
    %c0_i32 = arith.constant 0 : i32
    %c0_i32_0 = arith.constant 0 : i32
    %c0_i32_1 = arith.constant 0 : i32
    return %c0_i32, %c0_i32_0 : i32, i32
  }
  func.func @transform_1(%arg0: i32) -> (i32, i32) {
    %c0_i32 = arith.constant 0 : i32
    %c0_i32_0 = arith.constant 0 : i32
    %c0_i32_1 = arith.constant 0 : i32
    return %c0_i32, %c0_i32_0 : i32, i32
  }
  func.func @transform_2(%arg0: i32) -> (i32, i32) {
    %c0_i32 = arith.constant 0 : i32
    %c0_i32_0 = arith.constant 0 : i32
    %c0_i32_1 = arith.constant 0 : i32
    return %c0_i32, %c0_i32_0 : i32, i32
  }
  func.func @transform_3(%arg0: i32) -> (i32, i32, i32) {
    %c0_i32 = arith.constant 0 : i32
    %c0_i32_0 = arith.constant 0 : i32
    %c0_i32_1 = arith.constant 0 : i32
    %c0_i32_2 = arith.constant 0 : i32
    return %c0_i32, %c0_i32_0, %c0_i32_1 : i32, i32, i32
  }
  func.func @transform_4(%arg0: i32) -> (i32, i32, i32) {
    %c0_i32 = arith.constant 0 : i32
    %c0_i32_0 = arith.constant 0 : i32
    %c0_i32_1 = arith.constant 0 : i32
    %c0_i32_2 = arith.constant 0 : i32
    return %c0_i32, %c0_i32_0, %c0_i32_1 : i32, i32, i32
  }
  func.func @transform_5(%arg0: i32) -> (i32, i32, i32) {
    %c0_i32 = arith.constant 0 : i32
    %c0_i32_0 = arith.constant 0 : i32
    %c0_i32_1 = arith.constant 0 : i32
    %c0_i32_2 = arith.constant 0 : i32
    return %c0_i32, %c0_i32_0, %c0_i32_1 : i32, i32, i32
  }
}

module attributes {stable_mosaic.version = 11 : i64} {
  func.func @mix_kernel(%arg0: i32, %arg1: i32, %arg2: memref<1x2x2x8x1xf32, #tpu.memory_space<vmem>>, %arg3: memref<1x2x8x256xbf16, #tpu.memory_space<vmem>>, %arg4: memref<1x2x8x256xbf16, #tpu.memory_space<vmem>>, %arg5: memref<1x2x8x256xf32, #tpu.memory_space<vmem>>) attributes {dimension_semantics = [#tpu.dimension_semantics<parallel>, #tpu.dimension_semantics<parallel>], iteration_bounds = array<i64: 2, 1>, scalar_prefetch = 0 : i64, scratch_operands = 0 : i64, tpu.core_type = #tpu.core_type<tc>, window_params = [{transform_indices = @transform_0, window_bounds = array<i64: 1, 2, 2, 8, 1>}, {transform_indices = @transform_1, window_bounds = array<i64: 1, 2, 8, 256>}, {transform_indices = @transform_2, window_bounds = array<i64: 1, 2, 8, 256>}, {transform_indices = @transform_3, window_bounds = array<i64: 1, 2, 8, 256>}]} {
    %c0 = arith.constant 0 : index
    %c0_0 = arith.constant 0 : index
    %c0_1 = arith.constant 0 : index
    %c0_2 = arith.constant 0 : index
    %c0_3 = arith.constant 0 : index
    %0 = vector.load %arg2[%c0, %c0_0, %c0_1, %c0_2, %c0_3] : memref<1x2x2x8x1xf32, #tpu.memory_space<vmem>>, vector<1x1x2x8x1xf32>
    %1 = vector.shape_cast %0 : vector<1x1x2x8x1xf32> to vector<2x8x1xf32>
    %c0_4 = arith.constant 0 : index
    %c0_5 = arith.constant 0 : index
    %c0_6 = arith.constant 0 : index
    %c0_7 = arith.constant 0 : index
    %2 = vector.load %arg3[%c0_4, %c0_5, %c0_6, %c0_7] : memref<1x2x8x256xbf16, #tpu.memory_space<vmem>>, vector<1x2x8x256xbf16>
    %3 = vector.shape_cast %2 : vector<1x2x8x256xbf16> to vector<2x8x256xbf16>
    %4 = arith.extf %3 : vector<2x8x256xbf16> to vector<2x8x256xf32>
    %5 = vector.broadcast %1 : vector<2x8x1xf32> to vector<2x8x256xf32>
    %6 = arith.mulf %5, %4 : vector<2x8x256xf32>
    %c0_8 = arith.constant 0 : index
    %c1 = arith.constant 1 : index
    %c0_9 = arith.constant 0 : index
    %c0_10 = arith.constant 0 : index
    %c0_11 = arith.constant 0 : index
    %7 = vector.load %arg2[%c0_8, %c1, %c0_9, %c0_10, %c0_11] : memref<1x2x2x8x1xf32, #tpu.memory_space<vmem>>, vector<1x1x2x8x1xf32>
    %8 = vector.shape_cast %7 : vector<1x1x2x8x1xf32> to vector<2x8x1xf32>
    %c0_12 = arith.constant 0 : index
    %c0_13 = arith.constant 0 : index
    %c0_14 = arith.constant 0 : index
    %c0_15 = arith.constant 0 : index
    %9 = vector.load %arg4[%c0_12, %c0_13, %c0_14, %c0_15] : memref<1x2x8x256xbf16, #tpu.memory_space<vmem>>, vector<1x2x8x256xbf16>
    %10 = vector.shape_cast %9 : vector<1x2x8x256xbf16> to vector<2x8x256xbf16>
    %11 = arith.extf %10 : vector<2x8x256xbf16> to vector<2x8x256xf32>
    %12 = vector.broadcast %8 : vector<2x8x1xf32> to vector<2x8x256xf32>
    %13 = arith.mulf %12, %11 : vector<2x8x256xf32>
    %14 = arith.addf %6, %13 : vector<2x8x256xf32>
    %c0_16 = arith.constant 0 : index
    %c0_17 = arith.constant 0 : index
    %c0_18 = arith.constant 0 : index
    %c0_19 = arith.constant 0 : index
    %15 = vector.load %arg5[%c0_16, %c0_17, %c0_18, %c0_19] : memref<1x2x8x256xf32, #tpu.memory_space<vmem>>, vector<1x2x8x256xf32>
    %16 = vector.shape_cast %15 : vector<1x2x8x256xf32> to vector<2x8x256xf32>
    %17 = vector.shape_cast %14 : vector<2x8x256xf32> to vector<1x2x8x256xf32>
    tpu.vector_store %arg5[%c0_16, %c0_17, %c0_18, %c0_19], %17 {strides = array<i32>} : memref<1x2x8x256xf32, #tpu.memory_space<vmem>>, vector<1x2x8x256xf32>,
    return
  }
  func.func @transform_0(%arg0: i32, %arg1: i32) -> (i32, i32, i32, i32, i32) {
    %c0_i32 = arith.constant 0 : i32
    %c0_i32_0 = arith.constant 0 : i32
    %c0_i32_1 = arith.constant 0 : i32
    %c0_i32_2 = arith.constant 0 : i32
    %c0_i32_3 = arith.constant 0 : i32
    return %arg0, %c0_i32, %c0_i32_0, %c0_i32_1, %c0_i32_2 : i32, i32, i32, i32, i32
  }
  func.func @transform_1(%arg0: i32, %arg1: i32) -> (i32, i32, i32, i32) {
    %c0_i32 = arith.constant 0 : i32
    %c0_i32_0 = arith.constant 0 : i32
    %c0_i32_1 = arith.constant 0 : i32
    return %arg0, %c0_i32, %c0_i32_0, %arg1 : i32, i32, i32, i32
  }
  func.func @transform_2(%arg0: i32, %arg1: i32) -> (i32, i32, i32, i32) {
    %c0_i32 = arith.constant 0 : i32
    %c0_i32_0 = arith.constant 0 : i32
    %c0_i32_1 = arith.constant 0 : i32
    return %arg0, %c0_i32, %c0_i32_0, %arg1 : i32, i32, i32, i32
  }
  func.func @transform_3(%arg0: i32, %arg1: i32) -> (i32, i32, i32, i32) {
    %c0_i32 = arith.constant 0 : i32
    %c0_i32_0 = arith.constant 0 : i32
    %c0_i32_1 = arith.constant 0 : i32
    return %arg0, %c0_i32, %c0_i32_0, %arg1 : i32, i32, i32, i32
  }
}

</mosaic_0001>

<llo_original>
// kernel: _lambda_.5
$region0: #{_lambda_.5}
  #allocation0 [shape = 'u32[]', space=smem, size = 0x4, offset = 0x4, fixed_abs, tag = 'smem constant byte address 0x4 - core index']
  #allocation1 [shape = 'u32[144,128]{1,0:T(1,128)}', space=vmem, size = 0x12000, scoped, tag = 'internal scratch']
  %s0 = inlined_call_operand.vmem [shape: bf16[8,512], index: 0, kind: input, shape index: {}]
  %s1 = inlined_call_operand.vmem [shape: bf16[4,8], index: 1, kind: input, shape index: {}]
  %s2 = inlined_call_operand.vmem [shape: f32[4,1], index: 2, kind: input, shape index: {}]
  %s3 = inlined_call_operand.vmem [shape: f32[4,1], index: 3, kind: input, shape index: {}]
  %s4 = inlined_call_operand.vmem [shape: bf16[4,512], index: 4, kind: output, shape index: {}]
  %s5 = sld [smem:[#allocation0]]
  $region26: #{_lambda_.5} parent=0
    _
  %s7 = ssub.s32 1, %s5
  %s8 = scalar_select 0, %s7, %s5
  // Predicated region
  $region2: #{_lambda_.5} parent=0 // pred_check
    _
  $region3: #{_lambda_.5} parent=0 // pred_check_branch
    %10 = sbr.rel (0) target = $region5
  $region4: #{_lambda_.5} parent=0 // pred_region
    _
  $region5: #{_lambda_.5} parent=0 // pred_fallthru
    _
  // Predicated region
  $region6: #{_lambda_.5} parent=0 // pred_check
    _
  $region7: #{_lambda_.5} parent=0 // pred_check_branch
    %12 = sbr.rel (0) target = $region9
  $region8: #{_lambda_.5} parent=0 // pred_region
    _
  $region9: #{_lambda_.5} parent=0 // pred_fallthru
    _
  // Predicated region
  $region10: #{_lambda_.5} parent=0 // pred_check
    _
  $region11: #{_lambda_.5} parent=0 // pred_check_branch
    %14 = sbr.rel (0) target = $region13
  $region12: #{_lambda_.5} parent=0 // pred_region
    _
  $region13: #{_lambda_.5} parent=0 // pred_fallthru
    _
  // Predicated region
  $region14: #{_lambda_.5} parent=0 // pred_check
    _
  $region15: #{_lambda_.5} parent=0 // pred_check_branch
    %16 = sbr.rel (0) target = $region17
  $region16: #{_lambda_.5} parent=0 // pred_region
    _
  $region17: #{_lambda_.5} parent=0 // pred_fallthru
    _
  %v18 = vld [vmem:[%s1] sm:$0x3]
  %v19 = vld [vmem:[%s0] sm:$0xff]
  %v20 = vld [vmem:[%s0 + $0x8] sm:$0xff]
  %v23 = vunpack.c.l.b16 %v19
  %v24 = vunpack.c.h.b16 %v19
  %v25 = vunpack.c.l.b16 %v20
  %v26 = vunpack.c.h.b16 %v20
  %v27 = vpack.c.b16 %v23, %v23
  %v28 = vpack.c.b16 %v24, %v24
  %v29 = vpack.c.b16 %v25, %v25
  %v30 = vpack.c.b16 %v26, %v26
  %vm31 = vcmask 64512
  %v33 = vsel %vm31, %v18, 0
  %vm35 = vcmask 1043456
  %v37 = vsel %vm35, %v27, 0
  %v40 = vsel %vm35, %v28, 0
  %v43 = vsel %vm35, %v29, 0
  %v46 = vsel %vm35, %v30, 0
  %48 = vmatprep.subr.bf16.mxu0 %v40
  %49 = vmatpush1.bf16.msra.mxu0 %v37
  %50 = vmatprep.subr.bf16.mxu0 0
  %51 = vmatpush1.bf16.msra.mxu0 0
  %52 = vmatprep.subr.bf16.mxu0 0
  %53 = vmatpush1.bf16.msra.mxu0 0
  %54 = vmatprep.subr.bf16.mxu0 0
  %55 = vmatpush1.bf16.msra.mxu0 0
  %56 = vmatprep.subr.bf16.mxu0 0
  %57 = vmatpush1.bf16.msra.mxu0 0
  %58 = vmatprep.subr.bf16.mxu0 0
  %59 = vmatpush1.bf16.msra.mxu0 0
  %60 = vmatprep.subr.bf16.mxu0 0
  %61 = vmatpush1.bf16.msra.mxu0 0
  %62 = vmatprep.subr.bf16.mxu0 0
  %63 = vmatpush1.bf16.msra.mxu0 0
  %64 = vmatprep.subr.bf16.mxu0 0
  %65 = vmatpush1.bf16.msra.mxu0 0
  %66 = vmatprep.subr.bf16.mxu0 0
  %67 = vmatpush1.bf16.msra.mxu0 0
  %68 = vmatprep.subr.bf16.mxu0 0
  %69 = vmatpush1.bf16.msra.mxu0 0
  %70 = vmatprep.subr.bf16.mxu0 0
  %71 = vmatpush1.bf16.msra.mxu0 0
  %72 = vmatprep.subr.bf16.mxu0 0
  %73 = vmatpush1.bf16.msra.mxu0 0
  %74 = vmatprep.subr.bf16.mxu0 0
  %75 = vmatpush1.bf16.msra.mxu0 0
  %76 = vmatprep.subr.bf16.mxu0 0
  %77 = vmatpush1.bf16.msra.mxu0 0
  %78 = vmatprep.subr.bf16.mxu0 0
  %79 = vmatpush1.bf16.msra.mxu0 0
  %80 = vmatprep.mubr.bf16.mxu0 0
  %81 = vmatmul.mubr.bf16.gmra.mrb[0].mxu0 %v33
  %v82 = vpop.f32.mrb[0].mxu0
  %v83 = vadd.f32 0.0, %v82
  %v84 = vpop.f32.mrb[0].mxu0
  %v85 = vadd.f32 0.0, %v84
  %v86 = vpop.f32.mrb[0].mxu0
  %v87 = vpop.f32.mrb[0].mxu0
  %88 = vdwg.mxu0
  %89 = vmatprep.subr.bf16.mxu0 %v46
  %90 = vmatpush1.bf16.msra.mxu0 %v43
  %91 = vmatprep.subr.bf16.mxu0 0
  %92 = vmatpush1.bf16.msra.mxu0 0
  %93 = vmatprep.subr.bf16.mxu0 0
  %94 = vmatpush1.bf16.msra.mxu0 0
  %95 = vmatprep.subr.bf16.mxu0 0
  %96 = vmatpush1.bf16.msra.mxu0 0
  %97 = vmatprep.subr.bf16.mxu0 0
  %98 = vmatpush1.bf16.msra.mxu0 0
  %99 = vmatprep.subr.bf16.mxu0 0
  %100 = vmatpush1.bf16.msra.mxu0 0
  %101 = vmatprep.subr.bf16.mxu0 0
  %102 = vmatpush1.bf16.msra.mxu0 0
  %103 = vmatprep.subr.bf16.mxu0 0
  %104 = vmatpush1.bf16.msra.mxu0 0
  %105 = vmatprep.subr.bf16.mxu0 0
  %106 = vmatpush1.bf16.msra.mxu0 0
  %107 = vmatprep.subr.bf16.mxu0 0
  %108 = vmatpush1.bf16.msra.mxu0 0
  %109 = vmatprep.subr.bf16.mxu0 0
  %110 = vmatpush1.bf16.msra.mxu0 0
  %111 = vmatprep.subr.bf16.mxu0 0
  %112 = vmatpush1.bf16.msra.mxu0 0
  %113 = vmatprep.subr.bf16.mxu0 0
  %114 = vmatpush1.bf16.msra.mxu0 0
  %115 = vmatprep.subr.bf16.mxu0 0
  %116 = vmatpush1.bf16.msra.mxu0 0
  %117 = vmatprep.subr.bf16.mxu0 0
  %118 = vmatpush1.bf16.msra.mxu0 0
  %119 = vmatprep.subr.bf16.mxu0 0
  %120 = vmatpush1.bf16.msra.mxu0 0
  %121 = vmatprep.mubr.bf16.mxu0 0
  %122 = vmatmul.mubr.bf16.gmra.mrb[0].mxu0 %v33
  %v123 = vpop.f32.mrb[0].mxu0
  %v124 = vadd.f32 0.0, %v123
  %v125 = vpop.f32.mrb[0].mxu0
  %v126 = vadd.f32 0.0, %v125
  %v127 = vpop.f32.mrb[0].mxu0
  %v128 = vpop.f32.mrb[0].mxu0
  %129 = vdwg.mxu0
  %v130 = vld [vmem:[%s2] sm:$0xf]
  %132 = vset.pattern.permute.xlu0 0
  %133 = vperm.xlu0 %132, %v130
  %v134 = vpop.permute.xlu0 %133
  %v136 = vmul.f32 %v83, %v134
  %v137 = vmul.f32 %v85, %v134
  %v138 = vmul.f32 %v124, %v134
  %v139 = vmul.f32 %v126, %v134
  %v140 = vld [vmem:[%s3] sm:$0xf]
  %142 = vset.pattern.permute.xlu0 0
  %143 = vperm.xlu0 %142, %v140
  %v144 = vpop.permute.xlu0 %143
  %v146 = vadd.f32 %v136, %v144
  %v147 = vadd.f32 %v137, %v144
  %v148 = vadd.f32 %v138, %v144
  %v149 = vadd.f32 %v139, %v144
  %vm150 = vcmp.gt.f32.partialorder %v146, 0.0
  %vm151 = vcmp.gt.f32.partialorder %v147, 0.0
  %vm152 = vcmp.gt.f32.partialorder %v148, 0.0
  %vm153 = vcmp.gt.f32.partialorder %v149, 0.0
  %v154 = vmul.f32 %v146, 0.2
  %v155 = vmul.f32 %v147, 0.2
  %v156 = vmul.f32 %v148, 0.2
  %v157 = vmul.f32 %v149, 0.2
  %v158 = vsel %vm150, %v146, %v154
  %v159 = vsel %vm151, %v147, %v155
  %v160 = vsel %vm152, %v148, %v156
  %v161 = vsel %vm153, %v149, %v157
  %v162 = vpack.c.bf16 %v158, %v158
  %v163 = vpack.c.bf16 %v159, %v159
  %v164 = vpack.c.bf16 %v160, %v160
  %v165 = vpack.c.bf16 %v161, %v161
  %v170 = vcombine.low %v162, %v163
  %v171 = vcombine.low %v164, %v165
  %v173 = vunpack.c.l.s4 1983009808
  %v174 = vunpack.c.0.s8 %v173
  %v175 = vlaneseq
  %v176 = vshrl.u32 %v175, 7
  %v177 = vsub.s32 %v174, %v176
  %v178 = vrot.slane %v170, %v177
  %v180 = vunpack.c.l.s4 1983009808
  %v181 = vunpack.c.0.s8 %v180
  %v182 = vlaneseq
  %v183 = vshrl.u32 %v182, 7
  %v184 = vsub.s32 %v181, %v183
  %v185 = vrot.slane %v171, %v184
  %v186 = vcombine.low %v178, %v185
  %188 = vst [vmem:[%s4] sm:$0xff] %v186
  // Predicated region
  $region18: #{_lambda_.5} parent=0 // pred_check
    _
  $region19: #{_lambda_.5} parent=0 // pred_check_branch
    %190 = sbr.rel (0) target = $region21
  $region20: #{_lambda_.5} parent=0 // pred_region
    _
  $region21: #{_lambda_.5} parent=0 // pred_fallthru
    _
  // Predicated region
  $region22: #{_lambda_.5} parent=0 // pred_check
    _
  $region23: #{_lambda_.5} parent=0 // pred_check_branch
    %192 = sbr.rel (0) target = $region25
  $region24: #{_lambda_.5} parent=0 // pred_region
    _
  $region25: #{_lambda_.5} parent=0 // pred_fallthru
    _

// kernel: _lambda_.7
$region0: #{_lambda_.7}
  #allocation0 [shape = 'u32[]', space=smem, size = 0x4, offset = 0x4, fixed_abs, tag = 'smem constant byte address 0x4 - core index']
  #allocation1 [shape = 'u32[144,128]{1,0:T(1,128)}', space=vmem, size = 0x12000, scoped, tag = 'internal scratch']
  %s0 = inlined_call_operand.vmem [shape: bf16[2,2,18,256], index: 0, kind: input, shape index: {}]
  %s1 = inlined_call_operand.vmem [shape: bf16[2,8,18], index: 1, kind: input, shape index: {}]
  %s2 = inlined_call_operand.vmem [shape: f32[2,8,1], index: 2, kind: input, shape index: {}]
  %s3 = inlined_call_operand.vmem [shape: f32[2,8,1], index: 3, kind: input, shape index: {}]
  %s4 = inlined_call_operand.vmem [shape: bf16[2,2,8,256], index: 4, kind: output, shape index: {0}]
  %s5 = inlined_call_operand.vmem [shape: f32[2,2,8,1], index: 5, kind: output, shape index: {1}]
  %6 = xla_tuple %s4, %s5
  %s7 = sld [smem:[#allocation0]]
  $region57: #{_lambda_.7} parent=0
    _
  %s9 = ssub.s32 1, %s7
  %s10 = scalar_select 0, %s9, %s7
  loop: start=0, step=1, limit=4
  $region2: #{_lambda_.7} parent=0 // loop_pre_header
    _
  $region3: #{_lambda_.7} parent=0 // loop_header
    %s12 = sphi 0, %s16
    %p13 = scmp.ge.s32.totalorder %s12, 4
    %s22 = sphi 0, %s24
    %s25 = sphi 0, %s22
    %s26 = sphi 0, %s25
    %s42 = sphi 0, %s26
    %s46 = sphi 0, %s46
    %s48 = sphi 0, %s46
    %s49 = sphi 0, %s48
    %s63 = sphi 0, %s49
    %s67 = sphi 0, %s67
    %s69 = sphi 0, %s67
    %s70 = sphi 0, %s69
    %s84 = sphi 0, %s70
    %s88 = sphi 0, %s88
    %s90 = sphi 0, %s88
    %s91 = sphi 0, %s90
    %s105 = sphi 0, %s91
    %s111 = sphi 0, %s113
    %s114 = sphi 0, %s111
    %s115 = sphi 0, %s114
    %s131 = sphi 0, %s115
    %s137 = sphi 0, %s139
    %s140 = sphi 0, %s137
    %s141 = sphi 0, %s140
    %s157 = sphi 0, %s141
  $region4: #{_lambda_.7} parent=0 // loop_header_branch
    %15 = sbr.rel (%p13) target = $region8
  $region5: #{_lambda_.7} parent=0 // loop_body
    %s17 = ssub.s32 %s12, 1
    %s18 = ssub.s32 %s12, 2
    %s19 = sadd.s32 %s12, 1
    %s20 = ssub.s32 %s12, %s19
    %p21 = scmp.eq.s32.totalorder %s20, 0
    %s23 = sadd.s32 %s22, 1
    %s24 = scalar_select %p21, %s22, %s23
    %p27 = pneg %p21
    %p28 = scmp.eq.s32.totalorder %s12, 1
    %p29 = por %p27, %p28
    %p30 = scmp.ne.s32.totalorder %s22, %s25
    %p31 = scmp.eq.s32.totalorder %s12, 0
    %p32 = por %p30, %p31
    %p33 = scmp.ne.s32.totalorder %s22, %s25
    %p34 = scmp.eq.s32.totalorder %s17, 1
    %p35 = por %p33, %p34
    %p36 = scmp.ne.s32.totalorder %s25, %s26
    %p37 = scmp.eq.s32.totalorder %s17, 0
    %p38 = por %p36, %p37
    %p39 = scmp.ne.s32.totalorder %s25, %s26
    %p40 = scmp.eq.s32.totalorder %s18, 1
    %p41 = por %p39, %p40
    %p43 = scmp.ne.s32.totalorder %s26, %s42
    %p44 = scmp.eq.s32.totalorder %s18, 0
    %p45 = por %p43, %p44
    %s47 = sadd.s32 %s46, 1
    %p50 = scmp.eq.s32.totalorder %s12, 1
    %p51 = scmp.ne.s32.totalorder %s46, %s48
    %p52 = scmp.eq.s32.totalorder %s12, 0
    %p53 = por %p51, %p52
    %p54 = scmp.ne.s32.totalorder %s46, %s48
    %p55 = scmp.eq.s32.totalorder %s17, 1
    %p56 = por %p54, %p55
    %p57 = scmp.ne.s32.totalorder %s48, %s49
    %p58 = scmp.eq.s32.totalorder %s17, 0
    %p59 = por %p57, %p58
    %p60 = scmp.ne.s32.totalorder %s48, %s49
    %p61 = scmp.eq.s32.totalorder %s18, 1
    %p62 = por %p60, %p61
    %p64 = scmp.ne.s32.totalorder %s49, %s63
    %p65 = scmp.eq.s32.totalorder %s18, 0
    %p66 = por %p64, %p65
    %s68 = sadd.s32 %s67, 1
    %p71 = scmp.eq.s32.totalorder %s12, 1
    %p72 = scmp.ne.s32.totalorder %s67, %s69
    %p73 = scmp.eq.s32.totalorder %s12, 0
    %p74 = por %p72, %p73
    %p75 = scmp.ne.s32.totalorder %s67, %s69
    %p76 = scmp.eq.s32.totalorder %s17, 1
    %p77 = por %p75, %p76
    %p78 = scmp.ne.s32.totalorder %s69, %s70
    %p79 = scmp.eq.s32.totalorder %s17, 0
    %p80 = por %p78, %p79
    %p81 = scmp.ne.s32.totalorder %s69, %s70
    %p82 = scmp.eq.s32.totalorder %s18, 1
    %p83 = por %p81, %p82
    %p85 = scmp.ne.s32.totalorder %s70, %s84
    %p86 = scmp.eq.s32.totalorder %s18, 0
    %p87 = por %p85, %p86
    %s89 = sadd.s32 %s88, 1
    %p92 = scmp.eq.s32.totalorder %s12, 1
    %p93 = scmp.ne.s32.totalorder %s88, %s90
    %p94 = scmp.eq.s32.totalorder %s12, 0
    %p95 = por %p93, %p94
    %p96 = scmp.ne.s32.totalorder %s88, %s90
    %p97 = scmp.eq.s32.totalorder %s17, 1
    %p98 = por %p96, %p97
    %p99 = scmp.ne.s32.totalorder %s90, %s91
    %p100 = scmp.eq.s32.totalorder %s17, 0
    %p101 = por %p99, %p100
    %p102 = scmp.ne.s32.totalorder %s90, %s91
    %p103 = scmp.eq.s32.totalorder %s18, 1
    %p104 = por %p102, %p103
    %p106 = scmp.ne.s32.totalorder %s91, %s105
    %p107 = scmp.eq.s32.totalorder %s18, 0
    %p108 = por %p106, %p107
    %s109 = ssub.s32 %s12, %s19
    %p110 = scmp.eq.s32.totalorder %s109, 0
    %s112 = sadd.s32 %s111, 1
    %s113 = scalar_select %p110, %s111, %s112
    %p116 = pneg %p110
    %p117 = scmp.eq.s32.totalorder %s12, 1
    %p118 = por %p116, %p117
    %p119 = scmp.ne.s32.totalorder %s111, %s114
    %p120 = scmp.eq.s32.totalorder %s12, 0
    %p121 = por %p119, %p120
    %p122 = scmp.ne.s32.totalorder %s111, %s114
    %p123 = scmp.eq.s32.totalorder %s17, 1
    %p124 = por %p122, %p123
    %p125 = scmp.ne.s32.totalorder %s114, %s115
    %p126 = scmp.eq.s32.totalorder %s17, 0
    %p127 = por %p125, %p126
    %p128 = scmp.ne.s32.totalorder %s114, %s115
    %p129 = scmp.eq.s32.totalorder %s18, 1
    %p130 = por %p128, %p129
    %p132 = scmp.ne.s32.totalorder %s115, %s131
    %p133 = scmp.eq.s32.totalorder %s18, 0
    %p134 = por %p132, %p133
    %s135 = ssub.s32 %s12, %s19
    %p136 = scmp.eq.s32.totalorder %s135, 0
    %s138 = sadd.s32 %s137, 1
    %s139 = scalar_select %p136, %s137, %s138
    %p142 = pneg %p136
    %p143 = scmp.eq.s32.totalorder %s12, 1
    %p144 = por %p142, %p143
    %p145 = scmp.ne.s32.totalorder %s137, %s140
    %p146 = scmp.eq.s32.totalorder %s12, 0
    %p147 = por %p145, %p146
    %p148 = scmp.ne.s32.totalorder %s137, %s140
    %p149 = scmp.eq.s32.totalorder %s17, 1
    %p150 = por %p148, %p149
    %p151 = scmp.ne.s32.totalorder %s140, %s141
    %p152 = scmp.eq.s32.totalorder %s17, 0
    %p153 = por %p151, %p152
    %p154 = scmp.ne.s32.totalorder %s140, %s141
    %p155 = scmp.eq.s32.totalorder %s18, 1
    %p156 = por %p154, %p155
    %p158 = scmp.ne.s32.totalorder %s141, %s157
    %p159 = scmp.eq.s32.totalorder %s18, 0
    %p160 = por %p158, %p159
    %p161 = scmp.le.s32.totalorder 1, %s12
    %p162 = scmp.lt.s32.totalorder %s12, 3
    %p163 = pnand %p161, %p162
    %p164 = pneg %p163
    // Predicated region
    $region9: #{_lambda_.7} parent=5 // pred_check
      _
    $region10: #{_lambda_.7} parent=5 // pred_check_branch
      %166 = sbr.rel (%p163) target = $region12
    $region11: #{_lambda_.7} parent=5 // pred_region
      %s167 = ssub.s32 %s12, 1
      // Predicated region
      $region13: #{_lambda_.7} parent=11 // pred_check
        %p168 = pneg %p59
      $region14: #{_lambda_.7} parent=11 // pred_check_branch
        %170 = sbr.rel (%p168) target = $region16
      $region15: #{_lambda_.7} parent=11 // pred_region
        _
      $region16: #{_lambda_.7} parent=11 // pred_fallthru
        _
      // Predicated region
      $region17: #{_lambda_.7} parent=11 // pred_check
        %p171 = pneg %p80
      $region18: #{_lambda_.7} parent=11 // pred_check_branch
        %173 = sbr.rel (%p171) target = $region20
      $region19: #{_lambda_.7} parent=11 // pred_region
        _
      $region20: #{_lambda_.7} parent=11 // pred_fallthru
        _
      // Predicated region
      $region21: #{_lambda_.7} parent=11 // pred_check
        %p174 = pneg %p101
      $region22: #{_lambda_.7} parent=11 // pred_check_branch
        %176 = sbr.rel (%p174) target = $region24
      $region23: #{_lambda_.7} parent=11 // pred_region
        _
      $region24: #{_lambda_.7} parent=11 // pred_fallthru
        _
    $region12: #{_lambda_.7} parent=5 // pred_fallthru
      _
    %p177 = scmp.lt.s32.totalorder %s12, 2
    // Predicated region
    $region25: #{_lambda_.7} parent=5 // pred_check
      %p178 = pneg %p177
    $region26: #{_lambda_.7} parent=5 // pred_check_branch
      %180 = sbr.rel (%p178) target = $region28
    $region27: #{_lambda_.7} parent=5 // pred_region
      // Predicated region
      $region29: #{_lambda_.7} parent=27 // pred_check
        %p181 = pneg %p32
      $region30: #{_lambda_.7} parent=27 // pred_check_branch
        %183 = sbr.rel (%p181) target = $region32
      $region31: #{_lambda_.7} parent=27 // pred_region
        %p184 = scmp.lt.s32.totalorder %s12, 1
        %s185 = scalar_select %p184, %s12, 1
        %s186 = smul.addr %s185, 12
        %s187 = smul.addr %s186, 4
        %s188 = scalar_lea.vmem %s0, %s187
      $region32: #{_lambda_.7} parent=27 // pred_fallthru
        _
    $region28: #{_lambda_.7} parent=5 // pred_fallthru
      _
    %p189 = scmp.le.s32.totalorder 1, %s12
    %p190 = scmp.lt.s32.totalorder %s12, 3
    %p191 = pnand %p189, %p190
    %p192 = pneg %p191
    // Predicated region
    $region33: #{_lambda_.7} parent=5 // pred_check
      _
    $region34: #{_lambda_.7} parent=5 // pred_check_branch
      %194 = sbr.rel (%p191) target = $region36
    $region35: #{_lambda_.7} parent=5 // pred_region
      %s195 = ssub.s32 %s12, 1
      %p196 = scmp.lt.s32.totalorder %s17, 1
      %s197 = scalar_select %p196, %s17, 1
      %s198 = smul.addr %s197, 12
      %s199 = smul.addr %s198, 4
      %s200 = scalar_lea.vmem %s0, %s199
      %p201 = pneg %p38
      %p202 = pneg %p35
      %p203 = pneg %p59
      %p204 = pneg %p56
      %p205 = pneg %p80
      %p206 = pneg %p77
      %p207 = pneg %p101
      %p208 = pneg %p98
      %p209 = pneg %p127
      %p210 = pneg %p124
      %p211 = scmp.lt.s32.totalorder %s17, 1
      %s212 = scalar_select %p211, %s17, 1
      %s213 = smul.addr %s212, 4
      %s214 = smul.addr %s213, 4
      %s215 = scalar_lea.vmem %s4, %s214
      %p216 = pneg %p153
      %p217 = pneg %p150
      %p218 = scmp.lt.s32.totalorder %s17, 1
      %s219 = scalar_select %p218, %s17, 1
      %s220 = smul.addr %s219, 2
      %s221 = smul.addr %s220, 8
      %s222 = scalar_lea.vmem %s5, %s221
      %p223 = scmp.lt.s32.totalorder %s17, 1
      %s224 = scalar_select %p223, %s17, 1
      %s225 = smul.addr %s224, 12
      %s226 = smul.addr %s225, 4
      %s227 = scalar_lea.vmem %s0, %s226
      %p228 = scmp.lt.s32.totalorder %s17, 1
      %s229 = scalar_select %p228, %s17, 1
      %s230 = smul.addr %s229, 4
      %s231 = smul.addr %s230, 4
      %s232 = scalar_lea.vmem %s4, %s231
      %p233 = scmp.lt.s32.totalorder %s17, 1
      %s234 = scalar_select %p233, %s17, 1
      %s235 = smul.addr %s234, 2
      %s236 = smul.addr %s235, 8
      %s237 = scalar_lea.vmem %s5, %s236
      %v239 = vld [vmem:[%s1] sm:$0xf]
      %v240 = vld [vmem:[%s227] sm:$0xff]
      %v241 = vld [vmem:[%s227 + $0x8] sm:$0xff]
      %v242 = vld [vmem:[%s227 + $0x10] sm:$0x11]
      %v246 = vunpack.c.l.b16 %v240
      %v247 = vunpack.c.h.b16 %v240
      %v248 = vunpack.c.l.b16 %v241
      %v249 = vunpack.c.h.b16 %v241
      %v250 = vunpack.c.l.b16 %v242
      %v251 = vunpack.c.h.b16 %v242
      %v252 = vpack.c.b16 %v248, %v246
      %v253 = vpack.c.b16 %v249, %v247
      %v254 = vpack.c.b16 %v250, %v250
      %v255 = vpack.c.b16 %v251, %v251
      %vm258 = vcmask 146432
      %v260 = vsel %vm258, %v239, 0
      %vm262 = vcmask 1040384
      %v264 = vsel %vm262, %v254, 0
      %v267 = vsel %vm262, %v255, 0
      %269 = vmatprep.subr.bf16.mxu0 %v253
      %270 = vmatpush1.bf16.msra.mxu0 %v252
      %271 = vmatprep.subr.bf16.mxu0 %v267
      %272 = vmatpush1.bf16.msra.mxu0 %v264
      %273 = vmatprep.subr.bf16.mxu0 0
      %274 = vmatpush1.bf16.msra.mxu0 0
      %275 = vmatprep.subr.bf16.mxu0 0
      %276 = vmatpush1.bf16.msra.mxu0 0
      %277 = vmatprep.subr.bf16.mxu0 0
      %278 = vmatpush1.bf16.msra.mxu0 0
      %279 = vmatprep.subr.bf16.mxu0 0
      %280 = vmatpush1.bf16.msra.mxu0 0
      %281 = vmatprep.subr.bf16.mxu0 0
      %282 = vmatpush1.bf16.msra.mxu0 0
      %283 = vmatprep.subr.bf16.mxu0 0
      %284 = vmatpush1.bf16.msra.mxu0 0
      %285 = vmatprep.subr.bf16.mxu0 0
      %286 = vmatpush1.bf16.msra.mxu0 0
      %287 = vmatprep.subr.bf16.mxu0 0
      %288 = vmatpush1.bf16.msra.mxu0 0
      %289 = vmatprep.subr.bf16.mxu0 0
      %290 = vmatpush1.bf16.msra.mxu0 0
      %291 = vmatprep.subr.bf16.mxu0 0
      %292 = vmatpush1.bf16.msra.mxu0 0
      %293 = vmatprep.subr.bf16.mxu0 0
      %294 = vmatpush1.bf16.msra.mxu0 0
      %295 = vmatprep.subr.bf16.mxu0 0
      %296 = vmatpush1.bf16.msra.mxu0 0
      %297 = vmatprep.subr.bf16.mxu0 0
      %298 = vmatpush1.bf16.msra.mxu0 0
      %299 = vmatprep.subr.bf16.mxu0 0
      %300 = vmatpush1.bf16.msra.mxu0 0
      %301 = vmatprep.mubr.bf16.mxu0 0
      %302 = vmatmul.mubr.bf16.gmra.mrb[0].mxu0 %v260
      %v303 = vpop.f32.mrb[0].mxu0
      %v304 = vadd.f32 0.0, %v303
      %v305 = vpop.f32.mrb[0].mxu0
      %v306 = vadd.f32 0.0, %v305
      %v307 = vpop.f32.mrb[0].mxu0
      %v308 = vpop.f32.mrb[0].mxu0
      %309 = vdwg.mxu0
      %v310 = vld [vmem:[%s2] sm:$0xff]
      %312 = vset.pattern.permute.xlu0 0
      %313 = vperm.xlu0 %312, %v310
      %v314 = vpop.permute.xlu0 %313
      %v316 = vmul.f32 %v304, %v314
      %v317 = vmul.f32 %v306, %v314
      %v318 = vld [vmem:[%s3] sm:$0xff]
      %320 = vset.pattern.permute.xlu0 0
      %321 = vperm.xlu0 %320, %v318
      %v322 = vpop.permute.xlu0 %321
      %v324 = vadd.f32 %v316, %v322
      %v325 = vadd.f32 %v317, %v322
      %vm326 = vcmp.gt.f32.partialorder %v324, 0.0
      %vm327 = vcmp.gt.f32.partialorder %v325, 0.0
      %v328 = vmul.f32 %v324, 0.2
      %v329 = vmul.f32 %v325, 0.2
      %v330 = vsel %vm326, %v324, %v328
      %v331 = vsel %vm327, %v325, %v329
      %v332 = vadd.f32 %v330, %v331
      %333 = vadd.xlane.f32.xlu0 %v332
      %v334 = vpop.xlane.xlu0 %333
      %v335 = vrcp.pop 256.0
      %v336 = vmul.f32 %v334, %v335
      %vm337 = vcmask 7168
      %338 = vst.msk [vmem:[%s237] sm:$0xff] %vm337, %v336
      %v339 = vpack.c.bf16 %v330, %v330
      %v340 = vpack.c.bf16 %v331, %v331
      %v343 = vunpack.c.l.b16 %v339
      %v344 = vunpack.c.l.b16 %v340
      %v345 = vpack.c.b16 %v344, %v343
      %347 = vst [vmem:[%s232] sm:$0xff] %v345
      %s348 = scalar_lea.vmem %s1, 4
      %v349 = vld [vmem:[%s348] sm:$0xf]
      %s350 = scalar_lea.vmem %s227, 24
      %v351 = vld [vmem:[%s350] sm:$0xff]
      %v352 = vld [vmem:[%s350 + $0x8] sm:$0xff]
      %v353 = vld [vmem:[%s350 + $0x10] sm:$0x11]
      %v357 = vunpack.c.l.b16 %v351
      %v358 = vunpack.c.h.b16 %v351
      %v359 = vunpack.c.l.b16 %v352
      %v360 = vunpack.c.h.b16 %v352
      %v361 = vunpack.c.l.b16 %v353
      %v362 = vunpack.c.h.b16 %v353
      %v363 = vpack.c.b16 %v359, %v357
      %v364 = vpack.c.b16 %v360, %v358
      %v365 = vpack.c.b16 %v361, %v361
      %v366 = vpack.c.b16 %v362, %v362
      %v370 = vsel %vm258, %v349, 0
      %v373 = vsel %vm262, %v365, 0
      %v376 = vsel %vm262, %v366, 0
      %378 = vmatprep.subr.bf16.mxu0 %v364
      %379 = vmatpush1.bf16.msra.mxu0 %v363
      %380 = vmatprep.subr.bf16.mxu0 %v376
      %381 = vmatpush1.bf16.msra.mxu0 %v373
      %382 = vmatprep.subr.bf16.mxu0 0
      %383 = vmatpush1.bf16.msra.mxu0 0
      %384 = vmatprep.subr.bf16.mxu0 0
      %385 = vmatpush1.bf16.msra.mxu0 0
      %386 = vmatprep.subr.bf16.mxu0 0
      %387 = vmatpush1.bf16.msra.mxu0 0
      %388 = vmatprep.subr.bf16.mxu0 0
      %389 = vmatpush1.bf16.msra.mxu0 0
      %390 = vmatprep.subr.bf16.mxu0 0
      %391 = vmatpush1.bf16.msra.mxu0 0
      %392 = vmatprep.subr.bf16.mxu0 0
      %393 = vmatpush1.bf16.msra.mxu0 0
      %394 = vmatprep.subr.bf16.mxu0 0
      %395 = vmatpush1.bf16.msra.mxu0 0
      %396 = vmatprep.subr.bf16.mxu0 0
      %397 = vmatpush1.bf16.msra.mxu0 0
      %398 = vmatprep.subr.bf16.mxu0 0
      %399 = vmatpush1.bf16.msra.mxu0 0
      %400 = vmatprep.subr.bf16.mxu0 0
      %401 = vmatpush1.bf16.msra.mxu0 0
      %402 = vmatprep.subr.bf16.mxu0 0
      %403 = vmatpush1.bf16.msra.mxu0 0
      %404 = vmatprep.subr.bf16.mxu0 0
      %405 = vmatpush1.bf16.msra.mxu0 0
      %406 = vmatprep.subr.bf16.mxu0 0
      %407 = vmatpush1.bf16.msra.mxu0 0
      %408 = vmatprep.subr.bf16.mxu0 0
      %409 = vmatpush1.bf16.msra.mxu0 0
      %410 = vmatprep.mubr.bf16.mxu0 0
      %411 = vmatmul.mubr.bf16.gmra.mrb[0].mxu0 %v370
      %v412 = vpop.f32.mrb[0].mxu0
      %v413 = vadd.f32 0.0, %v412
      %v414 = vpop.f32.mrb[0].mxu0
      %v415 = vadd.f32 0.0, %v414
      %v416 = vpop.f32.mrb[0].mxu0
      %v417 = vpop.f32.mrb[0].mxu0
      %418 = vdwg.mxu0
      %s419 = scalar_lea.vmem %s2, 8
      %v420 = vld [vmem:[%s419] sm:$0xff]
      %422 = vset.pattern.permute.xlu0 0
      %423 = vperm.xlu0 %422, %v420
      %v424 = vpop.permute.xlu0 %423
      %v426 = vmul.f32 %v413, %v424
      %v427 = vmul.f32 %v415, %v424
      %s428 = scalar_lea.vmem %s3, 8
      %v429 = vld [vmem:[%s428] sm:$0xff]
      %431 = vset.pattern.permute.xlu0 0
      %432 = vperm.xlu0 %431, %v429
      %v433 = vpop.permute.xlu0 %432
      %v435 = vadd.f32 %v426, %v433
      %v436 = vadd.f32 %v427, %v433
      %vm437 = vcmp.gt.f32.partialorder %v435, 0.0
      %vm438 = vcmp.gt.f32.partialorder %v436, 0.0
      %v439 = vmul.f32 %v435, 0.2
      %v440 = vmul.f32 %v436, 0.2
      %v441 = vsel %vm437, %v435, %v439
      %v442 = vsel %vm438, %v436, %v440
      %v443 = vadd.f32 %v441, %v442
      %444 = vadd.xlane.f32.xlu0 %v443
      %v445 = vpop.xlane.xlu0 %444
      %v446 = vmul.f32 %v445, %v335
      %s447 = scalar_lea.vmem %s237, 8
      %448 = vst.msk [vmem:[%s447] sm:$0xff] %vm337, %v446
      %v449 = vpack.c.bf16 %v441, %v441
      %v450 = vpack.c.bf16 %v442, %v442
      %v453 = vunpack.c.l.b16 %v449
      %v454 = vunpack.c.l.b16 %v450
      %v455 = vpack.c.b16 %v454, %v453
      %s457 = scalar_lea.vmem %s232, 8
      %458 = vst [vmem:[%s457] sm:$0xff] %v455
      %p459 = scmp.lt.s32.totalorder %s17, 1
      %s460 = scalar_select %p459, %s17, 1
      %s461 = smul.addr %s460, 4
      %s462 = smul.addr %s461, 4
      %s463 = scalar_lea.vmem %s4, %s462
      %p464 = scmp.lt.s32.totalorder %s17, 1
      %s465 = scalar_select %p464, %s17, 1
      %s466 = smul.addr %s465, 2
      %s467 = smul.addr %s466, 8
      %s468 = scalar_lea.vmem %s5, %s467
      // Predicated region
      $region37: #{_lambda_.7} parent=35 // pred_check
        %p469 = pneg %p124
      $region38: #{_lambda_.7} parent=35 // pred_check_branch
        %471 = sbr.rel (%p469) target = $region40
      $region39: #{_lambda_.7} parent=35 // pred_region
        _
      $region40: #{_lambda_.7} parent=35 // pred_fallthru
        _
      // Predicated region
      $region41: #{_lambda_.7} parent=35 // pred_check
        %p472 = pneg %p150
      $region42: #{_lambda_.7} parent=35 // pred_check_branch
        %474 = sbr.rel (%p472) target = $region44
      $region43: #{_lambda_.7} parent=35 // pred_region
        _
      $region44: #{_lambda_.7} parent=35 // pred_fallthru
        _
    $region36: #{_lambda_.7} parent=5 // pred_fallthru
      _
    %p475 = scmp.le.s32.totalorder 2, %s12
    // Predicated region
    $region45: #{_lambda_.7} parent=5 // pred_check
      %p476 = pneg %p475
    $region46: #{_lambda_.7} parent=5 // pred_check_branch
      %478 = sbr.rel (%p476) target = $region48
    $region47: #{_lambda_.7} parent=5 // pred_region
      %s479 = ssub.s32 %s12, 2
      // Predicated region
      $region49: #{_lambda_.7} parent=47 // pred_check
        %p480 = pneg %p130
      $region50: #{_lambda_.7} parent=47 // pred_check_branch
        %482 = sbr.rel (%p480) target = $region52
      $region51: #{_lambda_.7} parent=47 // pred_region
        %p483 = scmp.lt.s32.totalorder %s18, 1
        %s484 = scalar_select %p483, %s18, 1
        %s485 = smul.addr %s484, 4
        %s486 = smul.addr %s485, 4
        %s487 = scalar_lea.vmem %s4, %s486
      $region52: #{_lambda_.7} parent=47 // pred_fallthru
        _
      // Predicated region
      $region53: #{_lambda_.7} parent=47 // pred_check
        %p488 = pneg %p156
      $region54: #{_lambda_.7} parent=47 // pred_check_branch
        %490 = sbr.rel (%p488) target = $region56
      $region55: #{_lambda_.7} parent=47 // pred_region
        %p491 = scmp.lt.s32.totalorder %s18, 1
        %s492 = scalar_select %p491, %s18, 1
        %s493 = smul.addr %s492, 2
        %s494 = smul.addr %s493, 8
        %s495 = scalar_lea.vmem %s5, %s494
      $region56: #{_lambda_.7} parent=47 // pred_fallthru
        _
    $region48: #{_lambda_.7} parent=5 // pred_fallthru
      _
  $region6: #{_lambda_.7} parent=0 // loop_footer
    %s16 = sadd.s32 1, %s12
  $region7: #{_lambda_.7} parent=0 // loop_footer_branch
    %11 = sbr.rel target = $region3
  $region8: #{_lambda_.7} parent=0 // loop_exit
    _

// kernel: _lambda_.6
$region0: #{_lambda_.6}
  #allocation0 [shape = 'u32[]', space=smem, size = 0x4, offset = 0x4, fixed_abs, tag = 'smem constant byte address 0x4 - core index']
  #allocation1 [shape = 'u32[144,128]{1,0:T(1,128)}', space=vmem, size = 0x12000, scoped, tag = 'internal scratch']
  %s0 = inlined_call_operand.vmem [shape: bf16[2,2,2,256], index: 0, kind: input, shape index: {}]
  %s1 = inlined_call_operand.vmem [shape: bf16[2,8,2], index: 1, kind: input, shape index: {}]
  %s2 = inlined_call_operand.vmem [shape: f32[2,8,1], index: 2, kind: input, shape index: {}]
  %s3 = inlined_call_operand.vmem [shape: f32[2,8,1], index: 3, kind: input, shape index: {}]
  %s4 = inlined_call_operand.vmem [shape: bf16[2,2,8,256], index: 4, kind: output, shape index: {0}]
  %s5 = inlined_call_operand.vmem [shape: f32[2,2,8,1], index: 5, kind: output, shape index: {1}]
  %6 = xla_tuple %s4, %s5
  %s7 = sld [smem:[#allocation0]]
  $region57: #{_lambda_.6} parent=0
    _
  %s9 = ssub.s32 1, %s7
  %s10 = scalar_select 0, %s9, %s7
  loop: start=0, step=1, limit=4
  $region2: #{_lambda_.6} parent=0 // loop_pre_header
    _
  $region3: #{_lambda_.6} parent=0 // loop_header
    %s12 = sphi 0, %s16
    %p13 = scmp.ge.s32.totalorder %s12, 4
    %s22 = sphi 0, %s24
    %s25 = sphi 0, %s22
    %s26 = sphi 0, %s25
    %s42 = sphi 0, %s26
    %s46 = sphi 0, %s46
    %s48 = sphi 0, %s46
    %s49 = sphi 0, %s48
    %s63 = sphi 0, %s49
    %s67 = sphi 0, %s67
    %s69 = sphi 0, %s67
    %s70 = sphi 0, %s69
    %s84 = sphi 0, %s70
    %s88 = sphi 0, %s88
    %s90 = sphi 0, %s88
    %s91 = sphi 0, %s90
    %s105 = sphi 0, %s91
    %s111 = sphi 0, %s113
    %s114 = sphi 0, %s111
    %s115 = sphi 0, %s114
    %s131 = sphi 0, %s115
    %s137 = sphi 0, %s139
    %s140 = sphi 0, %s137
    %s141 = sphi 0, %s140
    %s157 = sphi 0, %s141
  $region4: #{_lambda_.6} parent=0 // loop_header_branch
    %15 = sbr.rel (%p13) target = $region8
  $region5: #{_lambda_.6} parent=0 // loop_body
    %s17 = ssub.s32 %s12, 1
    %s18 = ssub.s32 %s12, 2
    %s19 = sadd.s32 %s12, 1
    %s20 = ssub.s32 %s12, %s19
    %p21 = scmp.eq.s32.totalorder %s20, 0
    %s23 = sadd.s32 %s22, 1
    %s24 = scalar_select %p21, %s22, %s23
    %p27 = pneg %p21
    %p28 = scmp.eq.s32.totalorder %s12, 1
    %p29 = por %p27, %p28
    %p30 = scmp.ne.s32.totalorder %s22, %s25
    %p31 = scmp.eq.s32.totalorder %s12, 0
    %p32 = por %p30, %p31
    %p33 = scmp.ne.s32.totalorder %s22, %s25
    %p34 = scmp.eq.s32.totalorder %s17, 1
    %p35 = por %p33, %p34
    %p36 = scmp.ne.s32.totalorder %s25, %s26
    %p37 = scmp.eq.s32.totalorder %s17, 0
    %p38 = por %p36, %p37
    %p39 = scmp.ne.s32.totalorder %s25, %s26
    %p40 = scmp.eq.s32.totalorder %s18, 1
    %p41 = por %p39, %p40
    %p43 = scmp.ne.s32.totalorder %s26, %s42
    %p44 = scmp.eq.s32.totalorder %s18, 0
    %p45 = por %p43, %p44
    %s47 = sadd.s32 %s46, 1
    %p50 = scmp.eq.s32.totalorder %s12, 1
    %p51 = scmp.ne.s32.totalorder %s46, %s48
    %p52 = scmp.eq.s32.totalorder %s12, 0
    %p53 = por %p51, %p52
    %p54 = scmp.ne.s32.totalorder %s46, %s48
    %p55 = scmp.eq.s32.totalorder %s17, 1
    %p56 = por %p54, %p55
    %p57 = scmp.ne.s32.totalorder %s48, %s49
    %p58 = scmp.eq.s32.totalorder %s17, 0
    %p59 = por %p57, %p58
    %p60 = scmp.ne.s32.totalorder %s48, %s49
    %p61 = scmp.eq.s32.totalorder %s18, 1
    %p62 = por %p60, %p61
    %p64 = scmp.ne.s32.totalorder %s49, %s63
    %p65 = scmp.eq.s32.totalorder %s18, 0
    %p66 = por %p64, %p65
    %s68 = sadd.s32 %s67, 1
    %p71 = scmp.eq.s32.totalorder %s12, 1
    %p72 = scmp.ne.s32.totalorder %s67, %s69
    %p73 = scmp.eq.s32.totalorder %s12, 0
    %p74 = por %p72, %p73
    %p75 = scmp.ne.s32.totalorder %s67, %s69
    %p76 = scmp.eq.s32.totalorder %s17, 1
    %p77 = por %p75, %p76
    %p78 = scmp.ne.s32.totalorder %s69, %s70
    %p79 = scmp.eq.s32.totalorder %s17, 0
    %p80 = por %p78, %p79
    %p81 = scmp.ne.s32.totalorder %s69, %s70
    %p82 = scmp.eq.s32.totalorder %s18, 1
    %p83 = por %p81, %p82
    %p85 = scmp.ne.s32.totalorder %s70, %s84
    %p86 = scmp.eq.s32.totalorder %s18, 0
    %p87 = por %p85, %p86
    %s89 = sadd.s32 %s88, 1
    %p92 = scmp.eq.s32.totalorder %s12, 1
    %p93 = scmp.ne.s32.totalorder %s88, %s90
    %p94 = scmp.eq.s32.totalorder %s12, 0
    %p95 = por %p93, %p94
    %p96 = scmp.ne.s32.totalorder %s88, %s90
    %p97 = scmp.eq.s32.totalorder %s17, 1
    %p98 = por %p96, %p97
    %p99 = scmp.ne.s32.totalorder %s90, %s91
    %p100 = scmp.eq.s32.totalorder %s17, 0
    %p101 = por %p99, %p100
    %p102 = scmp.ne.s32.totalorder %s90, %s91
    %p103 = scmp.eq.s32.totalorder %s18, 1
    %p104 = por %p102, %p103
    %p106 = scmp.ne.s32.totalorder %s91, %s105
    %p107 = scmp.eq.s32.totalorder %s18, 0
    %p108 = por %p106, %p107
    %s109 = ssub.s32 %s12, %s19
    %p110 = scmp.eq.s32.totalorder %s109, 0
    %s112 = sadd.s32 %s111, 1
    %s113 = scalar_select %p110, %s111, %s112
    %p116 = pneg %p110
    %p117 = scmp.eq.s32.totalorder %s12, 1
    %p118 = por %p116, %p117
    %p119 = scmp.ne.s32.totalorder %s111, %s114
    %p120 = scmp.eq.s32.totalorder %s12, 0
    %p121 = por %p119, %p120
    %p122 = scmp.ne.s32.totalorder %s111, %s114
    %p123 = scmp.eq.s32.totalorder %s17, 1
    %p124 = por %p122, %p123
    %p125 = scmp.ne.s32.totalorder %s114, %s115
    %p126 = scmp.eq.s32.totalorder %s17, 0
    %p127 = por %p125, %p126
    %p128 = scmp.ne.s32.totalorder %s114, %s115
    %p129 = scmp.eq.s32.totalorder %s18, 1
    %p130 = por %p128, %p129
    %p132 = scmp.ne.s32.totalorder %s115, %s131
    %p133 = scmp.eq.s32.totalorder %s18, 0
    %p134 = por %p132, %p133
    %s135 = ssub.s32 %s12, %s19
    %p136 = scmp.eq.s32.totalorder %s135, 0
    %s138 = sadd.s32 %s137, 1
    %s139 = scalar_select %p136, %s137, %s138
    %p142 = pneg %p136
    %p143 = scmp.eq.s32.totalorder %s12, 1
    %p144 = por %p142, %p143
    %p145 = scmp.ne.s32.totalorder %s137, %s140
    %p146 = scmp.eq.s32.totalorder %s12, 0
    %p147 = por %p145, %p146
    %p148 = scmp.ne.s32.totalorder %s137, %s140
    %p149 = scmp.eq.s32.totalorder %s17, 1
    %p150 = por %p148, %p149
    %p151 = scmp.ne.s32.totalorder %s140, %s141
    %p152 = scmp.eq.s32.totalorder %s17, 0
    %p153 = por %p151, %p152
    %p154 = scmp.ne.s32.totalorder %s140, %s141
    %p155 = scmp.eq.s32.totalorder %s18, 1
    %p156 = por %p154, %p155
    %p158 = scmp.ne.s32.totalorder %s141, %s157
    %p159 = scmp.eq.s32.totalorder %s18, 0
    %p160 = por %p158, %p159
    %p161 = scmp.le.s32.totalorder 1, %s12
    %p162 = scmp.lt.s32.totalorder %s12, 3
    %p163 = pnand %p161, %p162
    %p164 = pneg %p163
    // Predicated region
    $region9: #{_lambda_.6} parent=5 // pred_check
      _
    $region10: #{_lambda_.6} parent=5 // pred_check_branch
      %166 = sbr.rel (%p163) target = $region12
    $region11: #{_lambda_.6} parent=5 // pred_region
      %s167 = ssub.s32 %s12, 1
      // Predicated region
      $region13: #{_lambda_.6} parent=11 // pred_check
        %p168 = pneg %p59
      $region14: #{_lambda_.6} parent=11 // pred_check_branch
        %170 = sbr.rel (%p168) target = $region16
      $region15: #{_lambda_.6} parent=11 // pred_region
        _
      $region16: #{_lambda_.6} parent=11 // pred_fallthru
        _
      // Predicated region
      $region17: #{_lambda_.6} parent=11 // pred_check
        %p171 = pneg %p80
      $region18: #{_lambda_.6} parent=11 // pred_check_branch
        %173 = sbr.rel (%p171) target = $region20
      $region19: #{_lambda_.6} parent=11 // pred_region
        _
      $region20: #{_lambda_.6} parent=11 // pred_fallthru
        _
      // Predicated region
      $region21: #{_lambda_.6} parent=11 // pred_check
        %p174 = pneg %p101
      $region22: #{_lambda_.6} parent=11 // pred_check_branch
        %176 = sbr.rel (%p174) target = $region24
      $region23: #{_lambda_.6} parent=11 // pred_region
        _
      $region24: #{_lambda_.6} parent=11 // pred_fallthru
        _
    $region12: #{_lambda_.6} parent=5 // pred_fallthru
      _
    %p177 = scmp.lt.s32.totalorder %s12, 2
    // Predicated region
    $region25: #{_lambda_.6} parent=5 // pred_check
      %p178 = pneg %p177
    $region26: #{_lambda_.6} parent=5 // pred_check_branch
      %180 = sbr.rel (%p178) target = $region28
    $region27: #{_lambda_.6} parent=5 // pred_region
      // Predicated region
      $region29: #{_lambda_.6} parent=27 // pred_check
        %p181 = pneg %p32
      $region30: #{_lambda_.6} parent=27 // pred_check_branch
        %183 = sbr.rel (%p181) target = $region32
      $region31: #{_lambda_.6} parent=27 // pred_region
        %p184 = scmp.lt.s32.totalorder %s12, 1
        %s185 = scalar_select %p184, %s12, 1
        %s186 = smul.addr %s185, 4
        %s187 = scalar_lea.vmem %s0, %s186
      $region32: #{_lambda_.6} parent=27 // pred_fallthru
        _
    $region28: #{_lambda_.6} parent=5 // pred_fallthru
      _
    %p188 = scmp.le.s32.totalorder 1, %s12
    %p189 = scmp.lt.s32.totalorder %s12, 3
    %p190 = pnand %p188, %p189
    %p191 = pneg %p190
    // Predicated region
    $region33: #{_lambda_.6} parent=5 // pred_check
      _
    $region34: #{_lambda_.6} parent=5 // pred_check_branch
      %193 = sbr.rel (%p190) target = $region36
    $region35: #{_lambda_.6} parent=5 // pred_region
      %s194 = ssub.s32 %s12, 1
      %p195 = scmp.lt.s32.totalorder %s17, 1
      %s196 = scalar_select %p195, %s17, 1
      %s197 = smul.addr %s196, 4
      %s198 = scalar_lea.vmem %s0, %s197
      %p199 = pneg %p38
      %p200 = pneg %p35
      %p201 = pneg %p59
      %p202 = pneg %p56
      %p203 = pneg %p80
      %p204 = pneg %p77
      %p205 = pneg %p101
      %p206 = pneg %p98
      %p207 = pneg %p127
      %p208 = pneg %p124
      %p209 = scmp.lt.s32.totalorder %s17, 1
      %s210 = scalar_select %p209, %s17, 1
      %s211 = smul.addr %s210, 4
      %s212 = smul.addr %s211, 4
      %s213 = scalar_lea.vmem %s4, %s212
      %p214 = pneg %p153
      %p215 = pneg %p150
      %p216 = scmp.lt.s32.totalorder %s17, 1
      %s217 = scalar_select %p216, %s17, 1
      %s218 = smul.addr %s217, 2
      %s219 = smul.addr %s218, 8
      %s220 = scalar_lea.vmem %s5, %s219
      %p221 = scmp.lt.s32.totalorder %s17, 1
      %s222 = scalar_select %p221, %s17, 1
      %s223 = smul.addr %s222, 4
      %s224 = scalar_lea.vmem %s0, %s223
      %p225 = scmp.lt.s32.totalorder %s17, 1
      %s226 = scalar_select %p225, %s17, 1
      %s227 = smul.addr %s226, 4
      %s228 = smul.addr %s227, 4
      %s229 = scalar_lea.vmem %s4, %s228
      %p230 = scmp.lt.s32.totalorder %s17, 1
      %s231 = scalar_select %p230, %s17, 1
      %s232 = smul.addr %s231, 2
      %s233 = smul.addr %s232, 8
      %s234 = scalar_lea.vmem %s5, %s233
      %v236 = vld [vmem:[%s1] sm:$0xf]
      %v237 = vld [vmem:[%s224] sm:$0x3]
      %v240 = vunpack.c.l.s4 1966171168
      %v241 = vunpack.c.0.s8 %v240
      %v242 = vlaneseq
      %v243 = vshrl.u32 %v242, 7
      %v244 = vsub.s32 %v241, %v243
      %v245 = vrot.slane %v237, %v244
      %v246 = vcombine.high %v245, %v245
      %v248 = vunpack.c.l.s4 1966171168
      %v249 = vunpack.c.0.s8 %v248
      %v250 = vlaneseq
      %v251 = vshrl.u32 %v250, 7
      %v252 = vsub.s32 %v249, %v251
      %v253 = vrot.slane %v245, %v252
      %v255 = vunpack.c.l.s4 1966171168
      %v256 = vunpack.c.0.s8 %v255
      %v257 = vlaneseq
      %v258 = vshrl.u32 %v257, 7
      %v259 = vsub.s32 %v256, %v258
      %v260 = vrot.slane %v246, %v259
      %vm261 = vcmask 15360
      %v263 = vsel %vm261, %v236, 0
      %vm265 = vcmask 1040384
      %v267 = vsel %vm265, %v253, 0
      %v270 = vsel %vm265, %v260, 0
      %272 = vmatprep.subr.bf16.mxu0 %v270
      %273 = vmatpush1.bf16.msra.mxu0 %v267
      %274 = vmatprep.subr.bf16.mxu0 0
      %275 = vmatpush1.bf16.msra.mxu0 0
      %276 = vmatprep.subr.bf16.mxu0 0
      %277 = vmatpush1.bf16.msra.mxu0 0
      %278 = vmatprep.subr.bf16.mxu0 0
      %279 = vmatpush1.bf16.msra.mxu0 0
      %280 = vmatprep.subr.bf16.mxu0 0
      %281 = vmatpush1.bf16.msra.mxu0 0
      %282 = vmatprep.subr.bf16.mxu0 0
      %283 = vmatpush1.bf16.msra.mxu0 0
      %284 = vmatprep.subr.bf16.mxu0 0
      %285 = vmatpush1.bf16.msra.mxu0 0
      %286 = vmatprep.subr.bf16.mxu0 0
      %287 = vmatpush1.bf16.msra.mxu0 0
      %288 = vmatprep.subr.bf16.mxu0 0
      %289 = vmatpush1.bf16.msra.mxu0 0
      %290 = vmatprep.subr.bf16.mxu0 0
      %291 = vmatpush1.bf16.msra.mxu0 0
      %292 = vmatprep.subr.bf16.mxu0 0
      %293 = vmatpush1.bf16.msra.mxu0 0
      %294 = vmatprep.subr.bf16.mxu0 0
      %295 = vmatpush1.bf16.msra.mxu0 0
      %296 = vmatprep.subr.bf16.mxu0 0
      %297 = vmatpush1.bf16.msra.mxu0 0
      %298 = vmatprep.subr.bf16.mxu0 0
      %299 = vmatpush1.bf16.msra.mxu0 0
      %300 = vmatprep.subr.bf16.mxu0 0
      %301 = vmatpush1.bf16.msra.mxu0 0
      %302 = vmatprep.subr.bf16.mxu0 0
      %303 = vmatpush1.bf16.msra.mxu0 0
      %304 = vmatprep.mubr.bf16.mxu0 0
      %305 = vmatmul.mubr.bf16.gmra.mrb[0].mxu0 %v263
      %v306 = vpop.f32.mrb[0].mxu0
      %v307 = vadd.f32 0.0, %v306
      %v308 = vpop.f32.mrb[0].mxu0
      %v309 = vadd.f32 0.0, %v308
      %v310 = vpop.f32.mrb[0].mxu0
      %v311 = vpop.f32.mrb[0].mxu0
      %312 = vdwg.mxu0
      %v313 = vld [vmem:[%s2] sm:$0xff]
      %315 = vset.pattern.permute.xlu0 0
      %316 = vperm.xlu0 %315, %v313
      %v317 = vpop.permute.xlu0 %316
      %v319 = vmul.f32 %v307, %v317
      %v320 = vmul.f32 %v309, %v317
      %v321 = vld [vmem:[%s3] sm:$0xff]
      %323 = vset.pattern.permute.xlu0 0
      %324 = vperm.xlu0 %323, %v321
      %v325 = vpop.permute.xlu0 %324
      %v327 = vadd.f32 %v319, %v325
      %v328 = vadd.f32 %v320, %v325
      %vm329 = vcmp.gt.f32.partialorder %v327, 0.0
      %vm330 = vcmp.gt.f32.partialorder %v328, 0.0
      %v331 = vmul.f32 %v327, 0.2
      %v332 = vmul.f32 %v328, 0.2
      %v333 = vsel %vm329, %v327, %v331
      %v334 = vsel %vm330, %v328, %v332
      %v335 = vadd.f32 %v333, %v334
      %336 = vadd.xlane.f32.xlu0 %v335
      %v337 = vpop.xlane.xlu0 %336
      %v338 = vrcp.pop 256.0
      %v339 = vmul.f32 %v337, %v338
      %vm340 = vcmask 7168
      %341 = vst.msk [vmem:[%s234] sm:$0xff] %vm340, %v339
      %v342 = vpack.c.bf16 %v333, %v333
      %v343 = vpack.c.bf16 %v334, %v334
      %v346 = vunpack.c.l.b16 %v342
      %v347 = vunpack.c.l.b16 %v343
      %v348 = vpack.c.b16 %v347, %v346
      %350 = vst [vmem:[%s229] sm:$0xff] %v348
      %s351 = scalar_lea.vmem %s1, 4
      %v352 = vld [vmem:[%s351] sm:$0xf]
      %s353 = scalar_lea.vmem %s224, 2
      %v354 = vld [vmem:[%s353] sm:$0x3]
      %v357 = vunpack.c.l.s4 1966171168
      %v358 = vunpack.c.0.s8 %v357
      %v359 = vlaneseq
      %v360 = vshrl.u32 %v359, 7
      %v361 = vsub.s32 %v358, %v360
      %v362 = vrot.slane %v354, %v361
      %v363 = vcombine.high %v362, %v362
      %v365 = vunpack.c.l.s4 1966171168
      %v366 = vunpack.c.0.s8 %v365
      %v367 = vlaneseq
      %v368 = vshrl.u32 %v367, 7
      %v369 = vsub.s32 %v366, %v368
      %v370 = vrot.slane %v362, %v369
      %v372 = vunpack.c.l.s4 1966171168
      %v373 = vunpack.c.0.s8 %v372
      %v374 = vlaneseq
      %v375 = vshrl.u32 %v374, 7
      %v376 = vsub.s32 %v373, %v375
      %v377 = vrot.slane %v363, %v376
      %v379 = vsel %vm261, %v352, 0
      %v382 = vsel %vm265, %v370, 0
      %v385 = vsel %vm265, %v377, 0
      %387 = vmatprep.subr.bf16.mxu0 %v385
      %388 = vmatpush1.bf16.msra.mxu0 %v382
      %389 = vmatprep.subr.bf16.mxu0 0
      %390 = vmatpush1.bf16.msra.mxu0 0
      %391 = vmatprep.subr.bf16.mxu0 0
      %392 = vmatpush1.bf16.msra.mxu0 0
      %393 = vmatprep.subr.bf16.mxu0 0
      %394 = vmatpush1.bf16.msra.mxu0 0
      %395 = vmatprep.subr.bf16.mxu0 0
      %396 = vmatpush1.bf16.msra.mxu0 0
      %397 = vmatprep.subr.bf16.mxu0 0
      %398 = vmatpush1.bf16.msra.mxu0 0
      %399 = vmatprep.subr.bf16.mxu0 0
      %400 = vmatpush1.bf16.msra.mxu0 0
      %401 = vmatprep.subr.bf16.mxu0 0
      %402 = vmatpush1.bf16.msra.mxu0 0
      %403 = vmatprep.subr.bf16.mxu0 0
      %404 = vmatpush1.bf16.msra.mxu0 0
      %405 = vmatprep.subr.bf16.mxu0 0
      %406 = vmatpush1.bf16.msra.mxu0 0
      %407 = vmatprep.subr.bf16.mxu0 0
      %408 = vmatpush1.bf16.msra.mxu0 0
      %409 = vmatprep.subr.bf16.mxu0 0
      %410 = vmatpush1.bf16.msra.mxu0 0
      %411 = vmatprep.subr.bf16.mxu0 0
      %412 = vmatpush1.bf16.msra.mxu0 0
      %413 = vmatprep.subr.bf16.mxu0 0
      %414 = vmatpush1.bf16.msra.mxu0 0
      %415 = vmatprep.subr.bf16.mxu0 0
      %416 = vmatpush1.bf16.msra.mxu0 0
      %417 = vmatprep.subr.bf16.mxu0 0
      %418 = vmatpush1.bf16.msra.mxu0 0
      %419 = vmatprep.mubr.bf16.mxu0 0
      %420 = vmatmul.mubr.bf16.gmra.mrb[0].mxu0 %v379
      %v421 = vpop.f32.mrb[0].mxu0
      %v422 = vadd.f32 0.0, %v421
      %v423 = vpop.f32.mrb[0].mxu0
      %v424 = vadd.f32 0.0, %v423
      %v425 = vpop.f32.mrb[0].mxu0
      %v426 = vpop.f32.mrb[0].mxu0
      %427 = vdwg.mxu0
      %s428 = scalar_lea.vmem %s2, 8
      %v429 = vld [vmem:[%s428] sm:$0xff]
      %431 = vset.pattern.permute.xlu0 0
      %432 = vperm.xlu0 %431, %v429
      %v433 = vpop.permute.xlu0 %432
      %v435 = vmul.f32 %v422, %v433
      %v436 = vmul.f32 %v424, %v433
      %s437 = scalar_lea.vmem %s3, 8
      %v438 = vld [vmem:[%s437] sm:$0xff]
      %440 = vset.pattern.permute.xlu0 0
      %441 = vperm.xlu0 %440, %v438
      %v442 = vpop.permute.xlu0 %441
      %v444 = vadd.f32 %v435, %v442
      %v445 = vadd.f32 %v436, %v442
      %vm446 = vcmp.gt.f32.partialorder %v444, 0.0
      %vm447 = vcmp.gt.f32.partialorder %v445, 0.0
      %v448 = vmul.f32 %v444, 0.2
      %v449 = vmul.f32 %v445, 0.2
      %v450 = vsel %vm446, %v444, %v448
      %v451 = vsel %vm447, %v445, %v449
      %v452 = vadd.f32 %v450, %v451
      %453 = vadd.xlane.f32.xlu0 %v452
      %v454 = vpop.xlane.xlu0 %453
      %v455 = vmul.f32 %v454, %v338
      %s456 = scalar_lea.vmem %s234, 8
      %457 = vst.msk [vmem:[%s456] sm:$0xff] %vm340, %v455
      %v458 = vpack.c.bf16 %v450, %v450
      %v459 = vpack.c.bf16 %v451, %v451
      %v462 = vunpack.c.l.b16 %v458
      %v463 = vunpack.c.l.b16 %v459
      %v464 = vpack.c.b16 %v463, %v462
      %s466 = scalar_lea.vmem %s229, 8
      %467 = vst [vmem:[%s466] sm:$0xff] %v464
      %p468 = scmp.lt.s32.totalorder %s17, 1
      %s469 = scalar_select %p468, %s17, 1
      %s470 = smul.addr %s469, 4
      %s471 = smul.addr %s470, 4
      %s472 = scalar_lea.vmem %s4, %s471
      %p473 = scmp.lt.s32.totalorder %s17, 1
      %s474 = scalar_select %p473, %s17, 1
      %s475 = smul.addr %s474, 2
      %s476 = smul.addr %s475, 8
      %s477 = scalar_lea.vmem %s5, %s476
      // Predicated region
      $region37: #{_lambda_.6} parent=35 // pred_check
        %p478 = pneg %p124
      $region38: #{_lambda_.6} parent=35 // pred_check_branch
        %480 = sbr.rel (%p478) target = $region40
      $region39: #{_lambda_.6} parent=35 // pred_region
        _
      $region40: #{_lambda_.6} parent=35 // pred_fallthru
        _
      // Predicated region
      $region41: #{_lambda_.6} parent=35 // pred_check
        %p481 = pneg %p150
      $region42: #{_lambda_.6} parent=35 // pred_check_branch
        %483 = sbr.rel (%p481) target = $region44
      $region43: #{_lambda_.6} parent=35 // pred_region
        _
      $region44: #{_lambda_.6} parent=35 // pred_fallthru
        _
    $region36: #{_lambda_.6} parent=5 // pred_fallthru
      _
    %p484 = scmp.le.s32.totalorder 2, %s12
    // Predicated region
    $region45: #{_lambda_.6} parent=5 // pred_check
      %p485 = pneg %p484
    $region46: #{_lambda_.6} parent=5 // pred_check_branch
      %487 = sbr.rel (%p485) target = $region48
    $region47: #{_lambda_.6} parent=5 // pred_region
      %s488 = ssub.s32 %s12, 2
      // Predicated region
      $region49: #{_lambda_.6} parent=47 // pred_check
        %p489 = pneg %p130
      $region50: #{_lambda_.6} parent=47 // pred_check_branch
        %491 = sbr.rel (%p489) target = $region52
      $region51: #{_lambda_.6} parent=47 // pred_region
        %p492 = scmp.lt.s32.totalorder %s18, 1
        %s493 = scalar_select %p492, %s18, 1
        %s494 = smul.addr %s493, 4
        %s495 = smul.addr %s494, 4
        %s496 = scalar_lea.vmem %s4, %s495
      $region52: #{_lambda_.6} parent=47 // pred_fallthru
        _
      // Predicated region
      $region53: #{_lambda_.6} parent=47 // pred_check
        %p497 = pneg %p156
      $region54: #{_lambda_.6} parent=47 // pred_check_branch
        %499 = sbr.rel (%p497) target = $region56
      $region55: #{_lambda_.6} parent=47 // pred_region
        %p500 = scmp.lt.s32.totalorder %s18, 1
        %s501 = scalar_select %p500, %s18, 1
        %s502 = smul.addr %s501, 2
        %s503 = smul.addr %s502, 8
        %s504 = scalar_lea.vmem %s5, %s503
      $region56: #{_lambda_.6} parent=47 // pred_fallthru
        _
    $region48: #{_lambda_.6} parent=5 // pred_fallthru
      _
  $region6: #{_lambda_.6} parent=0 // loop_footer
    %s16 = sadd.s32 1, %s12
  $region7: #{_lambda_.6} parent=0 // loop_footer_branch
    %11 = sbr.rel target = $region3
  $region8: #{_lambda_.6} parent=0 // loop_exit
    _

// kernel: _lambda_.8
$region0: #{_lambda_.8}
  #allocation0 [shape = 'u32[]', space=smem, size = 0x4, offset = 0x4, fixed_abs, tag = 'smem constant byte address 0x4 - core index']
  #allocation1 [shape = 'u32[144,128]{1,0:T(1,128)}', space=vmem, size = 0x12000, scoped, tag = 'internal scratch']
  %s0 = inlined_call_operand.vmem [shape: f32[2,16], index: 0, kind: input, shape index: {}]
  %s1 = inlined_call_operand.vmem [shape: f32[16,4], index: 1, kind: input, shape index: {}]
  %s2 = inlined_call_operand.vmem [shape: f32[1,4], index: 2, kind: input, shape index: {}]
  %s3 = inlined_call_operand.vmem [shape: f32[2,4,16], index: 3, kind: input, shape index: {}]
  %s4 = inlined_call_operand.vmem [shape: f32[2,1,16], index: 4, kind: input, shape index: {}]
  %s5 = inlined_call_operand.vmem [shape: f32[2,2,16], index: 5, kind: output, shape index: {}]
  %s6 = sld [smem:[#allocation0]]
  $region30: #{_lambda_.8} parent=0
    _
  %s8 = ssub.s32 1, %s6
  %s9 = scalar_select 0, %s8, %s6
  // Predicated region
  $region2: #{_lambda_.8} parent=0 // pred_check
    _
  $region3: #{_lambda_.8} parent=0 // pred_check_branch
    %11 = sbr.rel (0) target = $region5
  $region4: #{_lambda_.8} parent=0 // pred_region
    _
  $region5: #{_lambda_.8} parent=0 // pred_fallthru
    _
  // Predicated region
  $region6: #{_lambda_.8} parent=0 // pred_check
    _
  $region7: #{_lambda_.8} parent=0 // pred_check_branch
    %13 = sbr.rel (0) target = $region9
  $region8: #{_lambda_.8} parent=0 // pred_region
    _
  $region9: #{_lambda_.8} parent=0 // pred_fallthru
    _
  // Predicated region
  $region10: #{_lambda_.8} parent=0 // pred_check
    _
  $region11: #{_lambda_.8} parent=0 // pred_check_branch
    %15 = sbr.rel (0) target = $region13
  $region12: #{_lambda_.8} parent=0 // pred_region
    _
  $region13: #{_lambda_.8} parent=0 // pred_fallthru
    _
  // Predicated region
  $region14: #{_lambda_.8} parent=0 // pred_check
    _
  $region15: #{_lambda_.8} parent=0 // pred_check_branch
    %17 = sbr.rel (0) target = $region17
  $region16: #{_lambda_.8} parent=0 // pred_region
    _
  $region17: #{_lambda_.8} parent=0 // pred_fallthru
    _
  // Predicated region
  $region18: #{_lambda_.8} parent=0 // pred_check
    _
  $region19: #{_lambda_.8} parent=0 // pred_check_branch
    %19 = sbr.rel (0) target = $region21
  $region20: #{_lambda_.8} parent=0 // pred_region
    _
  $region21: #{_lambda_.8} parent=0 // pred_fallthru
    _
  %v20 = vld [vmem:[%s0] sm:$0x3]
  %v21 = vld [vmem:[%s1] sm:$0xff]
  %v22 = vld [vmem:[%s1 + $0x8] sm:$0xff]
  %v23 = vld [vmem:[%s2] sm:$0x1]
  %v25 = vlaneseq
  %v26 = vshrl.u32 %v25, 7
  %v27 = vsub.s32 0, %v26
  %v28 = vrot.slane %v23, %v27
  %vm30 = vcmask 130048
  %v32 = vsel %vm30, %v20, 0
  %34 = vmatprep.subr.mxu0 0.0
  %35 = vmatpush1.msra.mxu0 %v21
  %36 = vmatprep.subr.mxu0 0.0
  %37 = vmatpush1.msra.mxu0 %v22
  %38 = vmatprep.subr.mxu0 0.0
  %39 = vmatpush1.msra.mxu0 0.0
  %40 = vmatprep.subr.mxu0 0.0
  %41 = vmatpush1.msra.mxu0 0.0
  %42 = vmatprep.subr.mxu0 0.0
  %43 = vmatpush1.msra.mxu0 0.0
  %44 = vmatprep.subr.mxu0 0.0
  %45 = vmatpush1.msra.mxu0 0.0
  %46 = vmatprep.subr.mxu0 0.0
  %47 = vmatpush1.msra.mxu0 0.0
  %48 = vmatprep.subr.mxu0 0.0
  %49 = vmatpush1.msra.mxu0 0.0
  %50 = vmatprep.subr.mxu0 0.0
  %51 = vmatpush1.msra.mxu0 0.0
  %52 = vmatprep.subr.mxu0 0.0
  %53 = vmatpush1.msra.mxu0 0.0
  %54 = vmatprep.subr.mxu0 0.0
  %55 = vmatpush1.msra.mxu0 0.0
  %56 = vmatprep.subr.mxu0 0.0
  %57 = vmatpush1.msra.mxu0 0.0
  %58 = vmatprep.subr.mxu0 0.0
  %59 = vmatpush1.msra.mxu0 0.0
  %60 = vmatprep.subr.mxu0 0.0
  %61 = vmatpush1.msra.mxu0 0.0
  %62 = vmatprep.subr.mxu0 0.0
  %63 = vmatpush1.msra.mxu0 0.0
  %64 = vmatprep.subr.mxu0 0.0
  %65 = vmatpush1.msra.mxu0 0.0
  %66 = vmatprep.subr.mxu0 0.0
  %67 = vmatpush1.msra.mxu0 0.0
  %68 = vmatprep.subr.mxu0 0.0
  %69 = vmatpush1.msra.mxu0 0.0
  %70 = vmatprep.subr.mxu0 0.0
  %71 = vmatpush1.msra.mxu0 0.0
  %72 = vmatprep.subr.mxu0 0.0
  %73 = vmatpush1.msra.mxu0 0.0
  %74 = vmatprep.subr.mxu0 0.0
  %75 = vmatpush1.msra.mxu0 0.0
  %76 = vmatprep.subr.mxu0 0.0
  %77 = vmatpush1.msra.mxu0 0.0
  %78 = vmatprep.subr.mxu0 0.0
  %79 = vmatpush1.msra.mxu0 0.0
  %80 = vmatprep.subr.mxu0 0.0
  %81 = vmatpush1.msra.mxu0 0.0
  %82 = vmatprep.subr.mxu0 0.0
  %83 = vmatpush1.msra.mxu0 0.0
  %84 = vmatprep.subr.mxu0 0.0
  %85 = vmatpush1.msra.mxu0 0.0
  %86 = vmatprep.subr.mxu0 0.0
  %87 = vmatpush1.msra.mxu0 0.0
  %88 = vmatprep.subr.mxu0 0.0
  %89 = vmatpush1.msra.mxu0 0.0
  %90 = vmatprep.subr.mxu0 0.0
  %91 = vmatpush1.msra.mxu0 0.0
  %92 = vmatprep.subr.mxu0 0.0
  %93 = vmatpush1.msra.mxu0 0.0
  %94 = vmatprep.subr.mxu0 0.0
  %95 = vmatpush1.msra.mxu0 0.0
  %96 = vmatprep.subr.mxu0 0.0
  %97 = vmatpush1.msra.mxu0 0.0
  %98 = vmatprep.mubr.f32.mxu0 0.0
  %99 = vmatmul.mubr.f32.gmra.mrb[0].mxu0 %v32
  %v100 = vpop.f32.mrb[0].mxu0
  %v101 = vadd.f32 %v28, %v100
  %v102 = vpop.f32.mrb[0].mxu0
  %103 = vdwg.mxu0
  %v104 = vld [vmem:[%s3] sm:$0xf]
  %v105 = vld [vmem:[%s4] sm:$0x1]
  %v107 = vlaneseq
  %v108 = vshrl.u32 %v107, 7
  %v109 = vsub.s32 0, %v108
  %v110 = vrot.slane %v105, %v109
  %vm112 = vcmask 31744
  %v114 = vsel %vm112, %v101, 0
  %vm116 = vcmask 1043456
  %v118 = vsel %vm116, %v104, 0
  %120 = vmatprep.subr.mxu0 0.0
  %121 = vmatpush1.msra.mxu0 %v118
  %122 = vmatprep.subr.mxu0 0.0
  %123 = vmatpush1.msra.mxu0 0.0
  %124 = vmatprep.subr.mxu0 0.0
  %125 = vmatpush1.msra.mxu0 0.0
  %126 = vmatprep.subr.mxu0 0.0
  %127 = vmatpush1.msra.mxu0 0.0
  %128 = vmatprep.subr.mxu0 0.0
  %129 = vmatpush1.msra.mxu0 0.0
  %130 = vmatprep.subr.mxu0 0.0
  %131 = vmatpush1.msra.mxu0 0.0
  %132 = vmatprep.subr.mxu0 0.0
  %133 = vmatpush1.msra.mxu0 0.0
  %134 = vmatprep.subr.mxu0 0.0
  %135 = vmatpush1.msra.mxu0 0.0
  %136 = vmatprep.subr.mxu0 0.0
  %137 = vmatpush1.msra.mxu0 0.0
  %138 = vmatprep.subr.mxu0 0.0
  %139 = vmatpush1.msra.mxu0 0.0
  %140 = vmatprep.subr.mxu0 0.0
  %141 = vmatpush1.msra.mxu0 0.0
  %142 = vmatprep.subr.mxu0 0.0
  %143 = vmatpush1.msra.mxu0 0.0
  %144 = vmatprep.subr.mxu0 0.0
  %145 = vmatpush1.msra.mxu0 0.0
  %146 = vmatprep.subr.mxu0 0.0
  %147 = vmatpush1.msra.mxu0 0.0
  %148 = vmatprep.subr.mxu0 0.0
  %149 = vmatpush1.msra.mxu0 0.0
  %150 = vmatprep.subr.mxu0 0.0
  %151 = vmatpush1.msra.mxu0 0.0
  %152 = vmatprep.subr.mxu0 0.0
  %153 = vmatpush1.msra.mxu0 0.0
  %154 = vmatprep.subr.mxu0 0.0
  %155 = vmatpush1.msra.mxu0 0.0
  %156 = vmatprep.subr.mxu0 0.0
  %157 = vmatpush1.msra.mxu0 0.0
  %158 = vmatprep.subr.mxu0 0.0
  %159 = vmatpush1.msra.mxu0 0.0
  %160 = vmatprep.subr.mxu0 0.0
  %161 = vmatpush1.msra.mxu0 0.0
  %162 = vmatprep.subr.mxu0 0.0
  %163 = vmatpush1.msra.mxu0 0.0
  %164 = vmatprep.subr.mxu0 0.0
  %165 = vmatpush1.msra.mxu0 0.0
  %166 = vmatprep.subr.mxu0 0.0
  %167 = vmatpush1.msra.mxu0 0.0
  %168 = vmatprep.subr.mxu0 0.0
  %169 = vmatpush1.msra.mxu0 0.0
  %170 = vmatprep.subr.mxu0 0.0
  %171 = vmatpush1.msra.mxu0 0.0
  %172 = vmatprep.subr.mxu0 0.0
  %173 = vmatpush1.msra.mxu0 0.0
  %174 = vmatprep.subr.mxu0 0.0
  %175 = vmatpush1.msra.mxu0 0.0
  %176 = vmatprep.subr.mxu0 0.0
  %177 = vmatpush1.msra.mxu0 0.0
  %178 = vmatprep.subr.mxu0 0.0
  %179 = vmatpush1.msra.mxu0 0.0
  %180 = vmatprep.subr.mxu0 0.0
  %181 = vmatpush1.msra.mxu0 0.0
  %182 = vmatprep.subr.mxu0 0.0
  %183 = vmatpush1.msra.mxu0 0.0
  %184 = vmatprep.mubr.f32.mxu0 0.0
  %185 = vmatmul.mubr.f32.gmra.mrb[0].mxu0 %v114
  %v186 = vpop.f32.mrb[0].mxu0
  %v187 = vadd.f32 %v110, %v186
  %v188 = vpop.f32.mrb[0].mxu0
  %189 = vdwg.mxu0
  %s190 = scalar_lea.vmem %s3, 4
  %v191 = vld [vmem:[%s190] sm:$0xf]
  %s192 = scalar_lea.vmem %s4, 1
  %v193 = vld [vmem:[%s192] sm:$0x1]
  %v195 = vlaneseq
  %v196 = vshrl.u32 %v195, 7
  %v197 = vsub.s32 0, %v196
  %v198 = vrot.slane %v193, %v197
  %v201 = vsel %vm116, %v191, 0
  %203 = vmatprep.subr.mxu0 0.0
  %204 = vmatpush1.msra.mxu0 %v201
  %205 = vmatprep.subr.mxu0 0.0
  %206 = vmatpush1.msra.mxu0 0.0
  %207 = vmatprep.subr.mxu0 0.0
  %208 = vmatpush1.msra.mxu0 0.0
  %209 = vmatprep.subr.mxu0 0.0
  %210 = vmatpush1.msra.mxu0 0.0
  %211 = vmatprep.subr.mxu0 0.0
  %212 = vmatpush1.msra.mxu0 0.0
  %213 = vmatprep.subr.mxu0 0.0
  %214 = vmatpush1.msra.mxu0 0.0
  %215 = vmatprep.subr.mxu0 0.0
  %216 = vmatpush1.msra.mxu0 0.0
  %217 = vmatprep.subr.mxu0 0.0
  %218 = vmatpush1.msra.mxu0 0.0
  %219 = vmatprep.subr.mxu0 0.0
  %220 = vmatpush1.msra.mxu0 0.0
  %221 = vmatprep.subr.mxu0 0.0
  %222 = vmatpush1.msra.mxu0 0.0
  %223 = vmatprep.subr.mxu0 0.0
  %224 = vmatpush1.msra.mxu0 0.0
  %225 = vmatprep.subr.mxu0 0.0
  %226 = vmatpush1.msra.mxu0 0.0
  %227 = vmatprep.subr.mxu0 0.0
  %228 = vmatpush1.msra.mxu0 0.0
  %229 = vmatprep.subr.mxu0 0.0
  %230 = vmatpush1.msra.mxu0 0.0
  %231 = vmatprep.subr.mxu0 0.0
  %232 = vmatpush1.msra.mxu0 0.0
  %233 = vmatprep.subr.mxu0 0.0
  %234 = vmatpush1.msra.mxu0 0.0
  %235 = vmatprep.subr.mxu0 0.0
  %236 = vmatpush1.msra.mxu0 0.0
  %237 = vmatprep.subr.mxu0 0.0
  %238 = vmatpush1.msra.mxu0 0.0
  %239 = vmatprep.subr.mxu0 0.0
  %240 = vmatpush1.msra.mxu0 0.0
  %241 = vmatprep.subr.mxu0 0.0
  %242 = vmatpush1.msra.mxu0 0.0
  %243 = vmatprep.subr.mxu0 0.0
  %244 = vmatpush1.msra.mxu0 0.0
  %245 = vmatprep.subr.mxu0 0.0
  %246 = vmatpush1.msra.mxu0 0.0
  %247 = vmatprep.subr.mxu0 0.0
  %248 = vmatpush1.msra.mxu0 0.0
  %249 = vmatprep.subr.mxu0 0.0
  %250 = vmatpush1.msra.mxu0 0.0
  %251 = vmatprep.subr.mxu0 0.0
  %252 = vmatpush1.msra.mxu0 0.0
  %253 = vmatprep.subr.mxu0 0.0
  %254 = vmatpush1.msra.mxu0 0.0
  %255 = vmatprep.subr.mxu0 0.0
  %256 = vmatpush1.msra.mxu0 0.0
  %257 = vmatprep.subr.mxu0 0.0
  %258 = vmatpush1.msra.mxu0 0.0
  %259 = vmatprep.subr.mxu0 0.0
  %260 = vmatpush1.msra.mxu0 0.0
  %261 = vmatprep.subr.mxu0 0.0
  %262 = vmatpush1.msra.mxu0 0.0
  %263 = vmatprep.subr.mxu0 0.0
  %264 = vmatpush1.msra.mxu0 0.0
  %265 = vmatprep.subr.mxu0 0.0
  %266 = vmatpush1.msra.mxu0 0.0
  %267 = vmatprep.mubr.f32.mxu0 0.0
  %268 = vmatmul.mubr.f32.gmra.mrb[0].mxu0 %v114
  %v269 = vpop.f32.mrb[0].mxu0
  %v270 = vadd.f32 %v198, %v269
  %v271 = vpop.f32.mrb[0].mxu0
  %272 = vdwg.mxu0
  %v273 = vmax.f32 %v187, %v270
  %v274 = vsub.f32 %v187, %v273
  %v275 = vmul.f32 %v274, 1.442695
  %v276 = vpow.pop %v275
  %v277 = vsub.f32 %v270, %v273
  %v278 = vmul.f32 %v277, 1.442695
  %v279 = vpow.pop %v278
  %v280 = vadd.f32 %v276, %v279
  %v281 = vrcp.pop %v280
  %v282 = vmul.f32 1.0, %v281
  %v283 = vmul.f32 %v276, %v282
  %vm284 = vcmask 123904
  %285 = vst.msk [vmem:[%s5] sm:$0x3] %vm284, %v283
  %v286 = vmul.f32 %v279, %v282
  %s287 = scalar_lea.vmem %s5, 2
  %288 = vst.msk [vmem:[%s287] sm:$0x3] %vm284, %v286
  // Predicated region
  $region22: #{_lambda_.8} parent=0 // pred_check
    _
  $region23: #{_lambda_.8} parent=0 // pred_check_branch
    %290 = sbr.rel (0) target = $region25
  $region24: #{_lambda_.8} parent=0 // pred_region
    _
  $region25: #{_lambda_.8} parent=0 // pred_fallthru
    _
  // Predicated region
  $region26: #{_lambda_.8} parent=0 // pred_check
    _
  $region27: #{_lambda_.8} parent=0 // pred_check_branch
    %292 = sbr.rel (0) target = $region29
  $region28: #{_lambda_.8} parent=0 // pred_region
    _
  $region29: #{_lambda_.8} parent=0 // pred_fallthru
    _

// kernel: _lambda_.9
$region0: #{_lambda_.9}
  #allocation0 [shape = 'u32[]', space=smem, size = 0x4, offset = 0x4, fixed_abs, tag = 'smem constant byte address 0x4 - core index']
  #allocation1 [shape = 'u32[144,128]{1,0:T(1,128)}', space=vmem, size = 0x12000, scoped, tag = 'internal scratch']
  %s0 = inlined_call_operand.vmem [shape: f32[2,2,2,8,1], index: 0, kind: input, shape index: {}]
  %s1 = inlined_call_operand.vmem [shape: bf16[2,2,8,256], index: 1, kind: input, shape index: {}]
  %s2 = inlined_call_operand.vmem [shape: bf16[2,2,8,256], index: 2, kind: input, shape index: {}]
  %s3 = inlined_call_operand.vmem [shape: f32[2,2,8,256], index: 3, kind: output, shape index: {}]
  %s4 = sld [smem:[#allocation0]]
  $region45: #{_lambda_.9} parent=0
    _
  %s6 = ssub.s32 1, %s4
  %s7 = scalar_select 0, %s6, %s4
  loop: start=0, step=1, limit=4
  $region2: #{_lambda_.9} parent=0 // loop_pre_header
    _
  $region3: #{_lambda_.9} parent=0 // loop_header
    %s9 = sphi 0, %s13
    %p10 = scmp.ge.s32.totalorder %s9, 4
    %s16 = sphi 0, %s28
    %s17 = sphi 0, %s24
    %s18 = sphi 0, %s16
    %s19 = sphi 0, %s17
    %s20 = sphi 0, %s18
    %s21 = sphi 0, %s19
    %s31 = sphi 0, %s33
    %s34 = sphi 0, %s31
    %s35 = sphi 0, %s34
    %s51 = sphi 0, %s35
    %s59 = sphi 0, %s61
    %s62 = sphi 0, %s59
    %s63 = sphi 0, %s62
    %s79 = sphi 0, %s63
    %s87 = sphi 0, %s89
    %s90 = sphi 0, %s87
    %s91 = sphi 0, %s90
    %s107 = sphi 0, %s91
    %s115 = sphi 0, %s117
    %s118 = sphi 0, %s115
    %s119 = sphi 0, %s118
    %s135 = sphi 0, %s119
  $region4: #{_lambda_.9} parent=0 // loop_header_branch
    %12 = sbr.rel (%p10) target = $region8
  $region5: #{_lambda_.9} parent=0 // loop_body
    %s14 = ssub.s32 %s9, 1
    %s15 = ssub.s32 %s9, 2
    %s22 = sadd.s32 1, %s17
    %p23 = scmp.ge.s32.totalorder %s22, 1
    %s24 = scalar_select %p23, 0, %s22
    %s25 = sadd.s32 1, %s16
    %s26 = scalar_select %p23, %s25, %s16
    %p27 = scmp.ge.s32.totalorder %s26, 2
    %s28 = scalar_select %p27, 0, %s26
    %s29 = ssub.s32 %s16, %s28
    %p30 = scmp.eq.s32.totalorder %s29, 0
    %s32 = sadd.s32 %s31, 1
    %s33 = scalar_select %p30, %s31, %s32
    %p36 = pneg %p30
    %p37 = scmp.eq.s32.totalorder %s9, 1
    %p38 = por %p36, %p37
    %p39 = scmp.ne.s32.totalorder %s31, %s34
    %p40 = scmp.eq.s32.totalorder %s9, 0
    %p41 = por %p39, %p40
    %p42 = scmp.ne.s32.totalorder %s31, %s34
    %p43 = scmp.eq.s32.totalorder %s14, 1
    %p44 = por %p42, %p43
    %p45 = scmp.ne.s32.totalorder %s34, %s35
    %p46 = scmp.eq.s32.totalorder %s14, 0
    %p47 = por %p45, %p46
    %p48 = scmp.ne.s32.totalorder %s34, %s35
    %p49 = scmp.eq.s32.totalorder %s15, 1
    %p50 = por %p48, %p49
    %p52 = scmp.ne.s32.totalorder %s35, %s51
    %p53 = scmp.eq.s32.totalorder %s15, 0
    %p54 = por %p52, %p53
    %s55 = ssub.s32 %s16, %s28
    %s56 = ssub.s32 %s17, %s24
    %s57 = sor.u32 %s55, %s56
    %p58 = scmp.eq.s32.totalorder %s57, 0
    %s60 = sadd.s32 %s59, 1
    %s61 = scalar_select %p58, %s59, %s60
    %p64 = pneg %p58
    %p65 = scmp.eq.s32.totalorder %s9, 1
    %p66 = por %p64, %p65
    %p67 = scmp.ne.s32.totalorder %s59, %s62
    %p68 = scmp.eq.s32.totalorder %s9, 0
    %p69 = por %p67, %p68
    %p70 = scmp.ne.s32.totalorder %s59, %s62
    %p71 = scmp.eq.s32.totalorder %s14, 1
    %p72 = por %p70, %p71
    %p73 = scmp.ne.s32.totalorder %s62, %s63
    %p74 = scmp.eq.s32.totalorder %s14, 0
    %p75 = por %p73, %p74
    %p76 = scmp.ne.s32.totalorder %s62, %s63
    %p77 = scmp.eq.s32.totalorder %s15, 1
    %p78 = por %p76, %p77
    %p80 = scmp.ne.s32.totalorder %s63, %s79
    %p81 = scmp.eq.s32.totalorder %s15, 0
    %p82 = por %p80, %p81
    %s83 = ssub.s32 %s16, %s28
    %s84 = ssub.s32 %s17, %s24
    %s85 = sor.u32 %s83, %s84
    %p86 = scmp.eq.s32.totalorder %s85, 0
    %s88 = sadd.s32 %s87, 1
    %s89 = scalar_select %p86, %s87, %s88
    %p92 = pneg %p86
    %p93 = scmp.eq.s32.totalorder %s9, 1
    %p94 = por %p92, %p93
    %p95 = scmp.ne.s32.totalorder %s87, %s90
    %p96 = scmp.eq.s32.totalorder %s9, 0
    %p97 = por %p95, %p96
    %p98 = scmp.ne.s32.totalorder %s87, %s90
    %p99 = scmp.eq.s32.totalorder %s14, 1
    %p100 = por %p98, %p99
    %p101 = scmp.ne.s32.totalorder %s90, %s91
    %p102 = scmp.eq.s32.totalorder %s14, 0
    %p103 = por %p101, %p102
    %p104 = scmp.ne.s32.totalorder %s90, %s91
    %p105 = scmp.eq.s32.totalorder %s15, 1
    %p106 = por %p104, %p105
    %p108 = scmp.ne.s32.totalorder %s91, %s107
    %p109 = scmp.eq.s32.totalorder %s15, 0
    %p110 = por %p108, %p109
    %s111 = ssub.s32 %s16, %s28
    %s112 = ssub.s32 %s17, %s24
    %s113 = sor.u32 %s111, %s112
    %p114 = scmp.eq.s32.totalorder %s113, 0
    %s116 = sadd.s32 %s115, 1
    %s117 = scalar_select %p114, %s115, %s116
    %p120 = pneg %p114
    %p121 = scmp.eq.s32.totalorder %s9, 1
    %p122 = por %p120, %p121
    %p123 = scmp.ne.s32.totalorder %s115, %s118
    %p124 = scmp.eq.s32.totalorder %s9, 0
    %p125 = por %p123, %p124
    %p126 = scmp.ne.s32.totalorder %s115, %s118
    %p127 = scmp.eq.s32.totalorder %s14, 1
    %p128 = por %p126, %p127
    %p129 = scmp.ne.s32.totalorder %s118, %s119
    %p130 = scmp.eq.s32.totalorder %s14, 0
    %p131 = por %p129, %p130
    %p132 = scmp.ne.s32.totalorder %s118, %s119
    %p133 = scmp.eq.s32.totalorder %s15, 1
    %p134 = por %p132, %p133
    %p136 = scmp.ne.s32.totalorder %s119, %s135
    %p137 = scmp.eq.s32.totalorder %s15, 0
    %p138 = por %p136, %p137
    %p139 = scmp.le.s32.totalorder 1, %s9
    %p140 = scmp.lt.s32.totalorder %s9, 3
    %p141 = pnand %p139, %p140
    %p142 = pneg %p141
    // Predicated region
    $region9: #{_lambda_.9} parent=5 // pred_check
      _
    $region10: #{_lambda_.9} parent=5 // pred_check_branch
      %144 = sbr.rel (%p141) target = $region12
    $region11: #{_lambda_.9} parent=5 // pred_region
      %s145 = ssub.s32 %s9, 1
    $region12: #{_lambda_.9} parent=5 // pred_fallthru
      _
    %p146 = scmp.lt.s32.totalorder %s9, 2
    // Predicated region
    $region13: #{_lambda_.9} parent=5 // pred_check
      %p147 = pneg %p146
    $region14: #{_lambda_.9} parent=5 // pred_check_branch
      %149 = sbr.rel (%p147) target = $region16
    $region15: #{_lambda_.9} parent=5 // pred_region
      // Predicated region
      $region17: #{_lambda_.9} parent=15 // pred_check
        %p150 = pneg %p41
      $region18: #{_lambda_.9} parent=15 // pred_check_branch
        %152 = sbr.rel (%p150) target = $region20
      $region19: #{_lambda_.9} parent=15 // pred_region
        %p153 = scmp.lt.s32.totalorder %s16, 1
        %s154 = scalar_select %p153, %s16, 1
        %s155 = smul.addr %s154, 4
        %s156 = smul.addr %s155, 8
        %s157 = scalar_lea.vmem %s0, %s156
      $region20: #{_lambda_.9} parent=15 // pred_fallthru
        _
      // Predicated region
      $region21: #{_lambda_.9} parent=15 // pred_check
        %p158 = pneg %p69
      $region22: #{_lambda_.9} parent=15 // pred_check_branch
        %160 = sbr.rel (%p158) target = $region24
      $region23: #{_lambda_.9} parent=15 // pred_region
        %s161 = smul.u32 2, %s17
        %p162 = scmp.lt.s32.totalorder %s16, 1
        %s163 = scalar_select %p162, %s16, 1
        %p164 = scmp.lt.s32.totalorder %s161, 1
        %s165 = scalar_select %p164, %s161, 1
        %s166 = smul.addr %s163, 4
        %s167 = sadd.s32 %s165, %s166
        %s168 = smul.addr %s167, 4
        %s169 = scalar_lea.vmem %s1, %s168
        %s170 = smul.u32 2, %s17
      $region24: #{_lambda_.9} parent=15 // pred_fallthru
        _
      // Predicated region
      $region25: #{_lambda_.9} parent=15 // pred_check
        %p171 = pneg %p97
      $region26: #{_lambda_.9} parent=15 // pred_check_branch
        %173 = sbr.rel (%p171) target = $region28
      $region27: #{_lambda_.9} parent=15 // pred_region
        %s174 = smul.u32 2, %s17
        %p175 = scmp.lt.s32.totalorder %s16, 1
        %s176 = scalar_select %p175, %s16, 1
        %p177 = scmp.lt.s32.totalorder %s174, 1
        %s178 = scalar_select %p177, %s174, 1
        %s179 = smul.addr %s176, 4
        %s180 = sadd.s32 %s178, %s179
        %s181 = smul.addr %s180, 4
        %s182 = scalar_lea.vmem %s2, %s181
        %s183 = smul.u32 2, %s17
      $region28: #{_lambda_.9} parent=15 // pred_fallthru
        _
    $region16: #{_lambda_.9} parent=5 // pred_fallthru
      _
    %p184 = scmp.le.s32.totalorder 1, %s9
    %p185 = scmp.lt.s32.totalorder %s9, 3
    %p186 = pnand %p184, %p185
    %p187 = pneg %p186
    // Predicated region
    $region29: #{_lambda_.9} parent=5 // pred_check
      _
    $region30: #{_lambda_.9} parent=5 // pred_check_branch
      %189 = sbr.rel (%p186) target = $region32
    $region31: #{_lambda_.9} parent=5 // pred_region
      %s190 = ssub.s32 %s9, 1
      %p191 = scmp.lt.s32.totalorder %s18, 1
      %s192 = scalar_select %p191, %s18, 1
      %s193 = smul.addr %s192, 4
      %s194 = smul.addr %s193, 8
      %s195 = scalar_lea.vmem %s0, %s194
      %p196 = pneg %p47
      %p197 = pneg %p44
      %s198 = smul.u32 2, %s19
      %p199 = scmp.lt.s32.totalorder %s18, 1
      %s200 = scalar_select %p199, %s18, 1
      %p201 = scmp.lt.s32.totalorder %s198, 1
      %s202 = scalar_select %p201, %s198, 1
      %s203 = smul.addr %s200, 4
      %s204 = sadd.s32 %s202, %s203
      %s205 = smul.addr %s204, 4
      %s206 = scalar_lea.vmem %s1, %s205
      %p207 = pneg %p75
      %p208 = pneg %p72
      %s209 = smul.u32 2, %s19
      %p210 = scmp.lt.s32.totalorder %s18, 1
      %s211 = scalar_select %p210, %s18, 1
      %p212 = scmp.lt.s32.totalorder %s209, 1
      %s213 = scalar_select %p212, %s209, 1
      %s214 = smul.addr %s211, 4
      %s215 = sadd.s32 %s213, %s214
      %s216 = smul.addr %s215, 4
      %s217 = scalar_lea.vmem %s2, %s216
      %p218 = pneg %p103
      %p219 = pneg %p100
      %p220 = pneg %p131
      %p221 = pneg %p128
      %s222 = smul.u32 2, %s19
      %p223 = scmp.lt.s32.totalorder %s18, 1
      %s224 = scalar_select %p223, %s18, 1
      %p225 = scmp.lt.s32.totalorder %s222, 1
      %s226 = scalar_select %p225, %s222, 1
      %s227 = smul.addr %s224, 4
      %s228 = sadd.s32 %s226, %s227
      %s229 = smul.addr %s228, 8
      %s230 = scalar_lea.vmem %s3, %s229
      %p231 = scmp.lt.s32.totalorder %s18, 1
      %s232 = scalar_select %p231, %s18, 1
      %s233 = smul.addr %s232, 4
      %s234 = smul.addr %s233, 8
      %s235 = scalar_lea.vmem %s0, %s234
      %s236 = smul.u32 2, %s19
      %p237 = scmp.lt.s32.totalorder %s18, 1
      %s238 = scalar_select %p237, %s18, 1
      %p239 = scmp.lt.s32.totalorder %s236, 1
      %s240 = scalar_select %p239, %s236, 1
      %s241 = smul.addr %s238, 4
      %s242 = sadd.s32 %s240, %s241
      %s243 = smul.addr %s242, 4
      %s244 = scalar_lea.vmem %s1, %s243
      %s245 = smul.u32 2, %s19
      %s246 = smul.u32 2, %s19
      %p247 = scmp.lt.s32.totalorder %s18, 1
      %s248 = scalar_select %p247, %s18, 1
      %p249 = scmp.lt.s32.totalorder %s246, 1
      %s250 = scalar_select %p249, %s246, 1
      %s251 = smul.addr %s248, 4
      %s252 = sadd.s32 %s250, %s251
      %s253 = smul.addr %s252, 4
      %s254 = scalar_lea.vmem %s2, %s253
      %s255 = smul.u32 2, %s19
      %s256 = smul.u32 2, %s19
      %p257 = scmp.lt.s32.totalorder %s18, 1
      %s258 = scalar_select %p257, %s18, 1
      %p259 = scmp.lt.s32.totalorder %s256, 1
      %s260 = scalar_select %p259, %s256, 1
      %s261 = smul.addr %s258, 4
      %s262 = sadd.s32 %s260, %s261
      %s263 = smul.addr %s262, 8
      %s264 = scalar_lea.vmem %s3, %s263
      %s265 = smul.u32 2, %s19
      %v266 = vld [vmem:[%s235] sm:$0xff]
      %v267 = vld [vmem:[%s235 + $0x8] sm:$0xff]
      %v268 = vld [vmem:[%s244] sm:$0xff]
      %v269 = vld [vmem:[%s244 + $0x8] sm:$0xff]
      %v270 = vunpack.c.l.bf16 %v268
      %v271 = vunpack.c.h.bf16 %v268
      %v272 = vunpack.c.l.bf16 %v269
      %v273 = vunpack.c.h.bf16 %v269
      %275 = vset.pattern.permute.xlu0 0
      %276 = vperm.xlu0 %275, %v266
      %v277 = vpop.permute.xlu0 %276
      %280 = vset.pattern.permute.xlu0 0
      %281 = vperm.xlu0 %280, %v267
      %v282 = vpop.permute.xlu0 %281
      %v284 = vmul.f32 %v277, %v270
      %v285 = vmul.f32 %v277, %v271
      %v286 = vmul.f32 %v282, %v272
      %v287 = vmul.f32 %v282, %v273
      %s288 = scalar_lea.vmem %s235, 16
      %v289 = vld [vmem:[%s288] sm:$0xff]
      %v290 = vld [vmem:[%s288 + $0x8] sm:$0xff]
      %v291 = vld [vmem:[%s254] sm:$0xff]
      %v292 = vld [vmem:[%s254 + $0x8] sm:$0xff]
      %v293 = vunpack.c.l.bf16 %v291
      %v294 = vunpack.c.h.bf16 %v291
      %v295 = vunpack.c.l.bf16 %v292
      %v296 = vunpack.c.h.bf16 %v292
      %298 = vset.pattern.permute.xlu0 0
      %299 = vperm.xlu0 %298, %v289
      %v300 = vpop.permute.xlu0 %299
      %303 = vset.pattern.permute.xlu0 0
      %304 = vperm.xlu0 %303, %v290
      %v305 = vpop.permute.xlu0 %304
      %v307 = vmul.f32 %v300, %v293
      %v308 = vmul.f32 %v300, %v294
      %v309 = vmul.f32 %v305, %v295
      %v310 = vmul.f32 %v305, %v296
      %v311 = vadd.f32 %v284, %v307
      %v312 = vadd.f32 %v285, %v308
      %v313 = vadd.f32 %v286, %v309
      %v314 = vadd.f32 %v287, %v310
      %315 = vst [vmem:[%s264] sm:$0xff] %v311
      %316 = vst [vmem:[%s264 + $0x8] sm:$0xff] %v312
      %317 = vst [vmem:[%s264 + $0x10] sm:$0xff] %v313
      %318 = vst [vmem:[%s264 + $0x18] sm:$0xff] %v314
      %s319 = smul.u32 2, %s19
      %p320 = scmp.lt.s32.totalorder %s18, 1
      %s321 = scalar_select %p320, %s18, 1
      %p322 = scmp.lt.s32.totalorder %s319, 1
      %s323 = scalar_select %p322, %s319, 1
      %s324 = smul.addr %s321, 4
      %s325 = sadd.s32 %s323, %s324
      %s326 = smul.addr %s325, 8
      %s327 = scalar_lea.vmem %s3, %s326
      // Predicated region
      $region33: #{_lambda_.9} parent=31 // pred_check
        %p328 = pneg %p128
      $region34: #{_lambda_.9} parent=31 // pred_check_branch
        %330 = sbr.rel (%p328) target = $region36
      $region35: #{_lambda_.9} parent=31 // pred_region
        %s331 = smul.u32 2, %s19
      $region36: #{_lambda_.9} parent=31 // pred_fallthru
        _
    $region32: #{_lambda_.9} parent=5 // pred_fallthru
      _
    %p332 = scmp.le.s32.totalorder 2, %s9
    // Predicated region
    $region37: #{_lambda_.9} parent=5 // pred_check
      %p333 = pneg %p332
    $region38: #{_lambda_.9} parent=5 // pred_check_branch
      %335 = sbr.rel (%p333) target = $region40
    $region39: #{_lambda_.9} parent=5 // pred_region
      %s336 = ssub.s32 %s9, 2
      // Predicated region
      $region41: #{_lambda_.9} parent=39 // pred_check
        %p337 = pneg %p134
      $region42: #{_lambda_.9} parent=39 // pred_check_branch
        %339 = sbr.rel (%p337) target = $region44
      $region43: #{_lambda_.9} parent=39 // pred_region
        %s340 = smul.u32 2, %s21
        %p341 = scmp.lt.s32.totalorder %s20, 1
        %s342 = scalar_select %p341, %s20, 1
        %p343 = scmp.lt.s32.totalorder %s340, 1
        %s344 = scalar_select %p343, %s340, 1
        %s345 = smul.addr %s342, 4
        %s346 = sadd.s32 %s344, %s345
        %s347 = smul.addr %s346, 8
        %s348 = scalar_lea.vmem %s3, %s347
      $region44: #{_lambda_.9} parent=39 // pred_fallthru
        _
    $region40: #{_lambda_.9} parent=5 // pred_fallthru
      _
  $region6: #{_lambda_.9} parent=0 // loop_footer
    %s13 = sadd.s32 1, %s9
  $region7: #{_lambda_.9} parent=0 // loop_footer_branch
    %8 = sbr.rel target = $region3
  $region8: #{_lambda_.9} parent=0 // loop_exit
    _

</llo_original>
